<compile_context>
chip_gen: v7x
topology: tpu7x:2x2x1
jax: 0.10.0
libtpu: 0.0.40
codegen_flags: <defaults>
</compile_context>

<pallas_src>
import jax
import jax.numpy as jnp
from jax.experimental import pallas as pl
from jax.experimental.pallas import tpu as pltpu


def _softplus(z):
    # matches torch.nn.functional.softplus (beta=1), numerically stable
    return jnp.maximum(z, 0.0) + jnp.log1p(jnp.exp(-jnp.abs(z)))


def _round_up(v, m):
    return (v + m - 1) // m * m


def _pack_params(params, compute_dtype):
    """Pack [W1|W2|W3] -> (d, d_pad + 2*n_pad), segments 128-aligned."""
    w1, w2, w3 = params["w1"], params["w2"], params["w3"]
    d = w1.shape[0]
    n = w2.shape[1]
    dp = _round_up(d, 128)
    npad = _round_up(n, 128)
    Np = dp + 2 * npad

    W = jnp.zeros((d, Np), jnp.float32)
    W = W.at[:, :d].set(w1)
    W = W.at[:, dp:dp + n].set(w2)
    W = W.at[:, dp + npad:dp + npad + n].set(w3)

    b = jnp.zeros((1, Np), jnp.float32)
    b = b.at[:, :d].set(params["b1"].reshape(1, d))
    b = b.at[:, dp:dp + n].set(params["b2"].reshape(1, n))
    b = b.at[:, dp + npad:dp + npad + n].set(params["b3"].reshape(1, n))

    return W.astype(compute_dtype), b, (d, dp, n, npad, Np)


def s6_forward(x, params, *, tm=512, compute_dtype=jnp.bfloat16):
    """x: (batch, seq, d_model) float32 -> y: (batch, seq, d_model) float32."""
    bsz, seq, d = x.shape
    W, bias, (_, dp, n, npad, Np) = _pack_params(params, compute_dtype)

    M = bsz * seq
    grid_m = pl.cdiv(M, tm)
    Mpad = grid_m * tm

    x2 = x.reshape(M, d)
    if Mpad != M:
        x2 = jnp.pad(x2, ((0, Mpad - M), (0, 0)))  # zero rows -> y rows are 0, sliced off

    def kernel(x_ref, w_ref, b_ref, y_ref):
        x_tile = x_ref[...]                                           # (tm, d) f32
        # single fused MXU matmul for fc1/fc2/fc3 (bf16 in, f32 accumulate)
        proj = jnp.dot(x_tile.astype(compute_dtype), w_ref[...],
                       preferred_element_type=jnp.float32)
        proj = proj + b_ref[...]                                      # f32 bias add
        delta = _softplus(proj[:, :d])                                # (tm, d)
        Bm = proj[:, dp:dp + n]                                       # (tm, n)
        Cm = proj[:, dp + npad:dp + npad + n]                         # (tm, n)
        # dA = exp(delta . A) multiplies a zero initial state, so it is elided.
        s = jnp.sum(Bm * Cm, axis=-1, keepdims=True)                  # (tm, 1)
        y_ref[...] = (x_tile * delta * s).astype(y_ref.dtype)

    w_bytes = d * Np * jnp.dtype(compute_dtype).itemsize + Np * 4
    tile_bytes = 2 * (tm * d * 4) * 2                                  # x + y, double-buffered
    vmem_limit = int(min(64 * 2**20, max(2 * (w_bytes * 2 + tile_bytes) + 4 * 2**20,
                                         32 * 2**20)))

    cost = pl.CostEstimate(
        flops=2 * Mpad * d * Np + 4 * Mpad * n + 4 * Mpad * d,
        transcendentals=2 * Mpad * d,                                  # exp + log1p in softplus
        bytes_accessed=Mpad * d * 4 * 2 + w_bytes,
    )

    y2 = pl.pallas_call(
        kernel,
        out_shape=jax.ShapeDtypeStruct((Mpad, d), jnp.float32),
        grid_spec=pltpu.PrefetchScalarGridSpec(
            num_scalar_prefetch=0,
            grid=(grid_m,),
            in_specs=[
                pl.BlockSpec((tm, d), lambda i: (i, 0)),   # x row tile
                pl.BlockSpec((d, Np), lambda i: (0, 0)),   # packed [W1|W2|W3]
                pl.BlockSpec((1, Np), lambda i: (0, 0)),   # packed [b1|b2|b3] (f32)
            ],
            out_specs=pl.BlockSpec((tm, d), lambda i: (i, 0)),
        ),
        compiler_params=pltpu.CompilerParams(
            dimension_semantics=("parallel",),
            vmem_limit_bytes=vmem_limit,
        ),
        cost_estimate=cost,
    )(x2, W, bias)

    return y2[:M].reshape(bsz, seq, d)


def init_params(key, d_model, state_size):
    """Deterministic synthetic init (shapes match the torch module)."""
    ks = jax.random.split(key, 7)

    def xavier(k, fan_in, fan_out):
        lim = (6.0 / (fan_in + fan_out)) ** 0.5
        return jax.random.uniform(k, (fan_in, fan_out), jnp.float32, -lim, lim)

    return {
        # Linear weights stored pre-transposed as (in, out); y = x @ W + b
        "w1": xavier(ks[0], d_model, d_model),
        "b1": jax.random.uniform(ks[1], (1, d_model), jnp.float32, -0.1, 0.1),
        "w2": xavier(ks[2], d_model, state_size),
        "b2": jax.random.uniform(ks[3], (1, state_size), jnp.float32, -0.1, 0.1),
        "w3": xavier(ks[4], d_model, state_size),
        "b3": jax.random.uniform(ks[5], (1, state_size), jnp.float32, -0.1, 0.1),
        "A":  xavier(ks[6], d_model, state_size),   # used by the reference only (h0 == 0)
    }


def s6_reference(x, p, matmul_dtype=None):
    """Plain-JAX reference mirroring the torch einsums exactly.

    Note: the dA term is exp(delta.A) * 0 here; it only matters if exp overflows
    (inf * 0 = NaN), which does not happen at these parameter scales.
    """
    def mm(a, w):
        if matmul_dtype is not None:
            a = a.astype(matmul_dtype)
            w = w.astype(matmul_dtype)
        return jnp.dot(a, w, preferred_element_type=jnp.float32)

    Bm = mm(x, p["w2"]) + p["b2"]
    Cm = mm(x, p["w3"]) + p["b3"]
    delta = _softplus(mm(x, p["w1"]) + p["b1"])
    dB = jnp.einsum("bld,bln->bldn", delta, Bm)
    dA = jnp.exp(jnp.einsum("bld,dn->bldn", delta, p["A"]))
    h = dA * jnp.zeros_like(dA) + x[..., None] * dB
    return jnp.einsum("bln,bldn->bld", Cm, h)


if __name__ == "__main__":
    # module constants: d_model=8, state_size=128, seq_len=100; small batch here
    batch, seq_len, d_model, state_size = 4, 100, 8, 128

    key = jax.random.PRNGKey(0)
    k_x, k_p = jax.random.split(key)
    x = jax.random.normal(k_x, (batch, seq_len, d_model), jnp.float32)
    params = init_params(k_p, d_model, state_size)

    y_exact = s6_reference(x, params)                       # torch-equivalent, pure f32

    # 1) f32 compute path: exact semantics (single-step grid, padded 400 -> 512)
    y_f32 = jax.block_until_ready(s6_forward(x, params, compute_dtype=jnp.float32))
    assert y_f32.shape == (batch, seq_len, d_model)
    assert jnp.allclose(y_f32, y_exact, atol=1e-4, rtol=1e-4)

    # 2) default bf16-MXU path: multi-step grid (tm=128 -> grid of 4, padded tail)
    y_bf16 = jax.block_until_ready(s6_forward(x, params, tm=128))
    y_ref_bf16 = s6_reference(x, params, matmul_dtype=jnp.bfloat16)
    assert y_bf16.shape == (batch, seq_len, d_model)
    assert jnp.allclose(y_bf16, y_ref_bf16, atol=1e-3, rtol=1e-3)

    print("KERNEL_OK")
</pallas_src>

<mosaic_0001>
module attributes {stable_mosaic.version = 11 : i64} {
  func.func @kernel(%arg0: i32, %arg1: memref<512x8xf32, #tpu.memory_space<vmem>>, %arg2: memref<8x384xf32, #tpu.memory_space<vmem>>, %arg3: memref<1x384xf32, #tpu.memory_space<vmem>>, %arg4: memref<512x8xf32, #tpu.memory_space<vmem>>) attributes {dimension_semantics = [#tpu.dimension_semantics<parallel>], iteration_bounds = array<i64: 1>, scalar_prefetch = 0 : i64, scratch_operands = 0 : i64, tpu.core_type = #tpu.core_type<tc>, window_params = [{transform_indices = @transform_0, window_bounds = array<i64: 512, 8>}, {pipeline_mode = #tpu.pipeline_mode<synchronous>, transform_indices = @transform_1, window_bounds = array<i64: 8, 384>}, {pipeline_mode = #tpu.pipeline_mode<synchronous>, transform_indices = @transform_2, window_bounds = array<i64: 1, 384>}, {transform_indices = @transform_3, window_bounds = array<i64: 512, 8>}]} {
    %c0 = arith.constant 0 : index
    %c0_0 = arith.constant 0 : index
    %0 = vector.load %arg1[%c0, %c0_0] : memref<512x8xf32, #tpu.memory_space<vmem>>, vector<512x8xf32>
    %c0_1 = arith.constant 0 : index
    %c0_2 = arith.constant 0 : index
    %1 = vector.load %arg2[%c0_1, %c0_2] : memref<8x384xf32, #tpu.memory_space<vmem>>, vector<8x384xf32>
    %cst = arith.constant dense<0.000000e+00> : vector<512x384xf32>
    %2 = tpu.matmul %0, %1, %cst {dimension_numbers = #tpu.dot_dimension_numbers<[1], [0], [0], [1], [0, 0, 1, 1], [], []>} : vector<512x8xf32>, vector<8x384xf32>, vector<512x384xf32> -> vector<512x384xf32>
    %c0_3 = arith.constant 0 : index
    %c0_4 = arith.constant 0 : index
    %3 = vector.load %arg3[%c0_3, %c0_4] : memref<1x384xf32, #tpu.memory_space<vmem>>, vector<1x384xf32>
    %4 = vector.broadcast %3 : vector<1x384xf32> to vector<512x384xf32>
    %5 = arith.addf %2, %4 : vector<512x384xf32>
    %6 = vector.extract_strided_slice %5 {offsets = [0, 0], sizes = [512, 8], strides = [1, 1]} : vector<512x384xf32> to vector<512x8xf32>
    %cst_5 = arith.constant 0.000000e+00 : f32
    %7 = vector.broadcast %cst_5 : f32 to vector<512x8xf32>
    %8 = arith.maximumf %6, %7 : vector<512x8xf32>
    %9 = math.absf %6 : vector<512x8xf32>
    %cst_6 = arith.constant 0.000000e+00 : f32
    %10 = vector.broadcast %cst_6 : f32 to vector<512x8xf32>
    %11 = arith.subf %10, %9 : vector<512x8xf32>
    %12 = math.exp %11 : vector<512x8xf32>
    %13 = math.log1p %12 : vector<512x8xf32>
    %14 = arith.addf %8, %13 : vector<512x8xf32>
    %15 = vector.extract_strided_slice %5 {offsets = [0, 128], sizes = [512, 128], strides = [1, 1]} : vector<512x384xf32> to vector<512x128xf32>
    %16 = vector.extract_strided_slice %5 {offsets = [0, 256], sizes = [512, 128], strides = [1, 1]} : vector<512x384xf32> to vector<512x128xf32>
    %17 = arith.mulf %15, %16 : vector<512x128xf32>
    %cst_7 = arith.constant dense<0.000000e+00> : vector<512xf32>
    %18 = vector.multi_reduction <add>, %17, %cst_7 [1] : vector<512x128xf32> to vector<512xf32>
    %19 = vector.shape_cast %18 : vector<512xf32> to vector<512x1xf32>
    %20 = arith.mulf %0, %14 : vector<512x8xf32>
    %21 = vector.broadcast %19 : vector<512x1xf32> to vector<512x8xf32>
    %22 = arith.mulf %20, %21 : vector<512x8xf32>
    %c0_8 = arith.constant 0 : index
    %c0_9 = arith.constant 0 : index
    %23 = vector.load %arg4[%c0_8, %c0_9] : memref<512x8xf32, #tpu.memory_space<vmem>>, vector<512x8xf32>
    tpu.vector_store %arg4[%c0_8, %c0_9], %22 {strides = array<i32>} : memref<512x8xf32, #tpu.memory_space<vmem>>, vector<512x8xf32>,
    return
  }
  func.func @transform_0(%arg0: i32) -> (i32, i32) {
    %c0_i32 = arith.constant 0 : i32
    %c0_i32_0 = arith.constant 0 : i32
    return %arg0, %c0_i32 : i32, i32
  }
  func.func @transform_1(%arg0: i32) -> (i32, i32) {
    %c0_i32 = arith.constant 0 : i32
    %c0_i32_0 = arith.constant 0 : i32
    %c0_i32_1 = arith.constant 0 : i32
    return %c0_i32, %c0_i32_0 : i32, i32
  }
  func.func @transform_2(%arg0: i32) -> (i32, i32) {
    %c0_i32 = arith.constant 0 : i32
    %c0_i32_0 = arith.constant 0 : i32
    %c0_i32_1 = arith.constant 0 : i32
    return %c0_i32, %c0_i32_0 : i32, i32
  }
  func.func @transform_3(%arg0: i32) -> (i32, i32) {
    %c0_i32 = arith.constant 0 : i32
    %c0_i32_0 = arith.constant 0 : i32
    return %arg0, %c0_i32 : i32, i32
  }
}

</mosaic_0001>

<llo_original>
// kernel: tpu_custom_call.1
$region0: #{tpu_custom_call.1}
  #allocation0 [shape = 'u32[]', space=smem, size = 0x4, offset = 0x4, fixed_abs, tag = 'smem constant byte address 0x4 - core index']
  #allocation1 [shape = 'u32[144,128]{1,0:T(1,128)}', space=vmem, size = 0x12000, scoped, tag = 'internal scratch']
  %s0 = inlined_call_operand.vmem [shape: f32[512,8], index: 0, kind: input, shape index: {}]
  %s1 = inlined_call_operand.vmem [shape: f32[8,384], index: 1, kind: input, shape index: {}]
  %s2 = inlined_call_operand.vmem [shape: f32[1,384], index: 2, kind: input, shape index: {}]
  %s3 = inlined_call_operand.vmem [shape: f32[512,8], index: 3, kind: output, shape index: {}]
  %s4 = sld [smem:[#allocation0]]
  $region22: #{tpu_custom_call.1} parent=0
    _
  %s6 = ssub.s32 1, %s4
  %s7 = scalar_select 0, %s6, %s4
  // Predicated region
  $region2: #{tpu_custom_call.1} parent=0 // pred_check
    _
  $region3: #{tpu_custom_call.1} parent=0 // pred_check_branch
    %9 = sbr.rel (0) target = $region5
  $region4: #{tpu_custom_call.1} parent=0 // pred_region
    _
  $region5: #{tpu_custom_call.1} parent=0 // pred_fallthru
    _
  // Predicated region
  $region6: #{tpu_custom_call.1} parent=0 // pred_check
    _
  $region7: #{tpu_custom_call.1} parent=0 // pred_check_branch
    %11 = sbr.rel (0) target = $region9
  $region8: #{tpu_custom_call.1} parent=0 // pred_region
    _
  $region9: #{tpu_custom_call.1} parent=0 // pred_fallthru
    _
  // Predicated region
  $region10: #{tpu_custom_call.1} parent=0 // pred_check
    _
  $region11: #{tpu_custom_call.1} parent=0 // pred_check_branch
    %13 = sbr.rel (0) target = $region13
  $region12: #{tpu_custom_call.1} parent=0 // pred_region
    _
  $region13: #{tpu_custom_call.1} parent=0 // pred_fallthru
    _
  %v14 = vld [vmem:[%s0] sm:$0xff]
  %v15 = vld [vmem:[%s0 + $0x8] sm:$0xff]
  %v16 = vld [vmem:[%s0 + $0x10] sm:$0xff]
  %v17 = vld [vmem:[%s0 + $0x18] sm:$0xff]
  %v18 = vld [vmem:[%s0 + $0x20] sm:$0xff]
  %v19 = vld [vmem:[%s0 + $0x28] sm:$0xff]
  %v20 = vld [vmem:[%s0 + $0x30] sm:$0xff]
  %v21 = vld [vmem:[%s0 + $0x38] sm:$0xff]
  %v22 = vld [vmem:[%s0 + $0x40] sm:$0xff]
  %v23 = vld [vmem:[%s0 + $0x48] sm:$0xff]
  %v24 = vld [vmem:[%s0 + $0x50] sm:$0xff]
  %v25 = vld [vmem:[%s0 + $0x58] sm:$0xff]
  %v26 = vld [vmem:[%s0 + $0x60] sm:$0xff]
  %v27 = vld [vmem:[%s0 + $0x68] sm:$0xff]
  %v28 = vld [vmem:[%s0 + $0x70] sm:$0xff]
  %v29 = vld [vmem:[%s0 + $0x78] sm:$0xff]
  %v30 = vld [vmem:[%s0 + $0x80] sm:$0xff]
  %v31 = vld [vmem:[%s0 + $0x88] sm:$0xff]
  %v32 = vld [vmem:[%s0 + $0x90] sm:$0xff]
  %v33 = vld [vmem:[%s0 + $0x98] sm:$0xff]
  %v34 = vld [vmem:[%s0 + $0xa0] sm:$0xff]
  %v35 = vld [vmem:[%s0 + $0xa8] sm:$0xff]
  %v36 = vld [vmem:[%s0 + $0xb0] sm:$0xff]
  %v37 = vld [vmem:[%s0 + $0xb8] sm:$0xff]
  %v38 = vld [vmem:[%s0 + $0xc0] sm:$0xff]
  %v39 = vld [vmem:[%s0 + $0xc8] sm:$0xff]
  %v40 = vld [vmem:[%s0 + $0xd0] sm:$0xff]
  %v41 = vld [vmem:[%s0 + $0xd8] sm:$0xff]
  %v42 = vld [vmem:[%s0 + $0xe0] sm:$0xff]
  %v43 = vld [vmem:[%s0 + $0xe8] sm:$0xff]
  %v44 = vld [vmem:[%s0 + $0xf0] sm:$0xff]
  %v45 = vld [vmem:[%s0 + $0xf8] sm:$0xff]
  %v46 = vld [vmem:[%s0 + $0x100] sm:$0xff]
  %v47 = vld [vmem:[%s0 + $0x108] sm:$0xff]
  %v48 = vld [vmem:[%s0 + $0x110] sm:$0xff]
  %v49 = vld [vmem:[%s0 + $0x118] sm:$0xff]
  %v50 = vld [vmem:[%s0 + $0x120] sm:$0xff]
  %v51 = vld [vmem:[%s0 + $0x128] sm:$0xff]
  %v52 = vld [vmem:[%s0 + $0x130] sm:$0xff]
  %v53 = vld [vmem:[%s0 + $0x138] sm:$0xff]
  %v54 = vld [vmem:[%s0 + $0x140] sm:$0xff]
  %v55 = vld [vmem:[%s0 + $0x148] sm:$0xff]
  %v56 = vld [vmem:[%s0 + $0x150] sm:$0xff]
  %v57 = vld [vmem:[%s0 + $0x158] sm:$0xff]
  %v58 = vld [vmem:[%s0 + $0x160] sm:$0xff]
  %v59 = vld [vmem:[%s0 + $0x168] sm:$0xff]
  %v60 = vld [vmem:[%s0 + $0x170] sm:$0xff]
  %v61 = vld [vmem:[%s0 + $0x178] sm:$0xff]
  %v62 = vld [vmem:[%s0 + $0x180] sm:$0xff]
  %v63 = vld [vmem:[%s0 + $0x188] sm:$0xff]
  %v64 = vld [vmem:[%s0 + $0x190] sm:$0xff]
  %v65 = vld [vmem:[%s0 + $0x198] sm:$0xff]
  %v66 = vld [vmem:[%s0 + $0x1a0] sm:$0xff]
  %v67 = vld [vmem:[%s0 + $0x1a8] sm:$0xff]
  %v68 = vld [vmem:[%s0 + $0x1b0] sm:$0xff]
  %v69 = vld [vmem:[%s0 + $0x1b8] sm:$0xff]
  %v70 = vld [vmem:[%s0 + $0x1c0] sm:$0xff]
  %v71 = vld [vmem:[%s0 + $0x1c8] sm:$0xff]
  %v72 = vld [vmem:[%s0 + $0x1d0] sm:$0xff]
  %v73 = vld [vmem:[%s0 + $0x1d8] sm:$0xff]
  %v74 = vld [vmem:[%s0 + $0x1e0] sm:$0xff]
  %v75 = vld [vmem:[%s0 + $0x1e8] sm:$0xff]
  %v76 = vld [vmem:[%s0 + $0x1f0] sm:$0xff]
  %v77 = vld [vmem:[%s0 + $0x1f8] sm:$0xff]
  %v78 = vld [vmem:[%s1] sm:$0xff]
  %v79 = vld [vmem:[%s1 + $0x8] sm:$0xff]
  %v80 = vld [vmem:[%s1 + $0x10] sm:$0xff]
  %v81 = vld [vmem:[%s2] sm:$0x7]
  %v83 = vlaneseq
  %v84 = vshrl.u32 %v83, 7
  %v85 = vsub.s32 0, %v84
  %v86 = vrot.slane %v81, %v85
  %v87 = vlaneseq
  %v88 = vshrl.u32 %v87, 7
  %v89 = vsub.s32 1, %v88
  %v90 = vrot.slane %v81, %v89
  %v91 = vlaneseq
  %v92 = vshrl.u32 %v91, 7
  %v93 = vsub.s32 2, %v92
  %v94 = vrot.slane %v81, %v93
  %vm98 = vcmask 64512
  %v100 = vsel %vm98, %v14, 0
  %v103 = vsel %vm98, %v15, 0
  %v106 = vsel %vm98, %v16, 0
  %v109 = vsel %vm98, %v17, 0
  %v112 = vsel %vm98, %v18, 0
  %v115 = vsel %vm98, %v19, 0
  %v118 = vsel %vm98, %v20, 0
  %v121 = vsel %vm98, %v21, 0
  %v124 = vsel %vm98, %v22, 0
  %v127 = vsel %vm98, %v23, 0
  %v130 = vsel %vm98, %v24, 0
  %v133 = vsel %vm98, %v25, 0
  %v136 = vsel %vm98, %v26, 0
  %v139 = vsel %vm98, %v27, 0
  %v142 = vsel %vm98, %v28, 0
  %v145 = vsel %vm98, %v29, 0
  %v148 = vsel %vm98, %v30, 0
  %v151 = vsel %vm98, %v31, 0
  %v154 = vsel %vm98, %v32, 0
  %v157 = vsel %vm98, %v33, 0
  %v160 = vsel %vm98, %v34, 0
  %v163 = vsel %vm98, %v35, 0
  %v166 = vsel %vm98, %v36, 0
  %v169 = vsel %vm98, %v37, 0
  %v172 = vsel %vm98, %v38, 0
  %v175 = vsel %vm98, %v39, 0
  %v178 = vsel %vm98, %v40, 0
  %v181 = vsel %vm98, %v41, 0
  %v184 = vsel %vm98, %v42, 0
  %v187 = vsel %vm98, %v43, 0
  %v190 = vsel %vm98, %v44, 0
  %v193 = vsel %vm98, %v45, 0
  %v196 = vsel %vm98, %v46, 0
  %v199 = vsel %vm98, %v47, 0
  %v202 = vsel %vm98, %v48, 0
  %v205 = vsel %vm98, %v49, 0
  %v208 = vsel %vm98, %v50, 0
  %v211 = vsel %vm98, %v51, 0
  %v214 = vsel %vm98, %v52, 0
  %v217 = vsel %vm98, %v53, 0
  %v220 = vsel %vm98, %v54, 0
  %v223 = vsel %vm98, %v55, 0
  %v226 = vsel %vm98, %v56, 0
  %v229 = vsel %vm98, %v57, 0
  %v232 = vsel %vm98, %v58, 0
  %v235 = vsel %vm98, %v59, 0
  %v238 = vsel %vm98, %v60, 0
  %v241 = vsel %vm98, %v61, 0
  %v244 = vsel %vm98, %v62, 0
  %v247 = vsel %vm98, %v63, 0
  %v250 = vsel %vm98, %v64, 0
  %v253 = vsel %vm98, %v65, 0
  %v256 = vsel %vm98, %v66, 0
  %v259 = vsel %vm98, %v67, 0
  %v262 = vsel %vm98, %v68, 0
  %v265 = vsel %vm98, %v69, 0
  %v268 = vsel %vm98, %v70, 0
  %v271 = vsel %vm98, %v71, 0
  %v274 = vsel %vm98, %v72, 0
  %v277 = vsel %vm98, %v73, 0
  %v280 = vsel %vm98, %v74, 0
  %v283 = vsel %vm98, %v75, 0
  %v286 = vsel %vm98, %v76, 0
  %v289 = vsel %vm98, %v77, 0
  %291 = vmatprep.subr.mxu0 %v79
  %292 = vmatpush1.msra.mxu0 %v78
  %293 = vmatprep.subr.mxu0 0.0
  %294 = vmatpush1.msra.mxu0 0.0
  %295 = vmatprep.subr.mxu0 0.0
  %296 = vmatpush1.msra.mxu0 0.0
  %297 = vmatprep.subr.mxu0 0.0
  %298 = vmatpush1.msra.mxu0 0.0
  %299 = vmatprep.subr.mxu0 0.0
  %300 = vmatpush1.msra.mxu0 0.0
  %301 = vmatprep.subr.mxu0 0.0
  %302 = vmatpush1.msra.mxu0 0.0
  %303 = vmatprep.subr.mxu0 0.0
  %304 = vmatpush1.msra.mxu0 0.0
  %305 = vmatprep.subr.mxu0 0.0
  %306 = vmatpush1.msra.mxu0 0.0
  %307 = vmatprep.subr.mxu0 0.0
  %308 = vmatpush1.msra.mxu0 0.0
  %309 = vmatprep.subr.mxu0 0.0
  %310 = vmatpush1.msra.mxu0 0.0
  %311 = vmatprep.subr.mxu0 0.0
  %312 = vmatpush1.msra.mxu0 0.0
  %313 = vmatprep.subr.mxu0 0.0
  %314 = vmatpush1.msra.mxu0 0.0
  %315 = vmatprep.subr.mxu0 0.0
  %316 = vmatpush1.msra.mxu0 0.0
  %317 = vmatprep.subr.mxu0 0.0
  %318 = vmatpush1.msra.mxu0 0.0
  %319 = vmatprep.subr.mxu0 0.0
  %320 = vmatpush1.msra.mxu0 0.0
  %321 = vmatprep.subr.mxu0 0.0
  %322 = vmatpush1.msra.mxu0 0.0
  %323 = vmatprep.subr.mxu0 0.0
  %324 = vmatpush1.msra.mxu0 0.0
  %325 = vmatprep.subr.mxu0 0.0
  %326 = vmatpush1.msra.mxu0 0.0
  %327 = vmatprep.subr.mxu0 0.0
  %328 = vmatpush1.msra.mxu0 0.0
  %329 = vmatprep.subr.mxu0 0.0
  %330 = vmatpush1.msra.mxu0 0.0
  %331 = vmatprep.subr.mxu0 0.0
  %332 = vmatpush1.msra.mxu0 0.0
  %333 = vmatprep.subr.mxu0 0.0
  %334 = vmatpush1.msra.mxu0 0.0
  %335 = vmatprep.subr.mxu0 0.0
  %336 = vmatpush1.msra.mxu0 0.0
  %337 = vmatprep.subr.mxu0 0.0
  %338 = vmatpush1.msra.mxu0 0.0
  %339 = vmatprep.subr.mxu0 0.0
  %340 = vmatpush1.msra.mxu0 0.0
  %341 = vmatprep.subr.mxu0 0.0
  %342 = vmatpush1.msra.mxu0 0.0
  %343 = vmatprep.subr.mxu0 0.0
  %344 = vmatpush1.msra.mxu0 0.0
  %345 = vmatprep.subr.mxu0 0.0
  %346 = vmatpush1.msra.mxu0 0.0
  %347 = vmatprep.subr.mxu0 0.0
  %348 = vmatpush1.msra.mxu0 0.0
  %349 = vmatprep.subr.mxu0 0.0
  %350 = vmatpush1.msra.mxu0 0.0
  %351 = vmatprep.subr.mxu0 0.0
  %352 = vmatpush1.msra.mxu0 0.0
  %353 = vmatprep.subr.mxu0 0.0
  %354 = vmatpush1.msra.mxu0 0.0
  %355 = vmatprep.mubr.f32.mxu0 0.0
  %356 = vmatmul.mubr.f32.gmra.mrb[0].mxu0 %v100
  %v357 = vpop.f32.mrb[0].mxu0
  %v358 = vadd.f32 %v86, %v357
  %v359 = vpop.f32.mrb[0].mxu0
  %v360 = vadd.f32 %v90, %v359
  %361 = vmatprep.mubr.f32.mxu0 0.0
  %362 = vmatmul.mubr.f32.gmra.mrb[0].mxu0 %v103
  %v363 = vpop.f32.mrb[0].mxu0
  %v364 = vadd.f32 %v86, %v363
  %v365 = vpop.f32.mrb[0].mxu0
  %v366 = vadd.f32 %v90, %v365
  %367 = vmatprep.mubr.f32.mxu0 0.0
  %368 = vmatmul.mubr.f32.gmra.mrb[0].mxu0 %v106
  %v369 = vpop.f32.mrb[0].mxu0
  %v370 = vadd.f32 %v86, %v369
  %v371 = vpop.f32.mrb[0].mxu0
  %v372 = vadd.f32 %v90, %v371
  %373 = vmatprep.mubr.f32.mxu0 0.0
  %374 = vmatmul.mubr.f32.gmra.mrb[0].mxu0 %v109
  %v375 = vpop.f32.mrb[0].mxu0
  %v376 = vadd.f32 %v86, %v375
  %v377 = vpop.f32.mrb[0].mxu0
  %v378 = vadd.f32 %v90, %v377
  %379 = vmatprep.mubr.f32.mxu0 0.0
  %380 = vmatmul.mubr.f32.gmra.mrb[0].mxu0 %v112
  %v381 = vpop.f32.mrb[0].mxu0
  %v382 = vadd.f32 %v86, %v381
  %v383 = vpop.f32.mrb[0].mxu0
  %v384 = vadd.f32 %v90, %v383
  %385 = vmatprep.mubr.f32.mxu0 0.0
  %386 = vmatmul.mubr.f32.gmra.mrb[0].mxu0 %v115
  %v387 = vpop.f32.mrb[0].mxu0
  %v388 = vadd.f32 %v86, %v387
  %v389 = vpop.f32.mrb[0].mxu0
  %v390 = vadd.f32 %v90, %v389
  %391 = vmatprep.mubr.f32.mxu0 0.0
  %392 = vmatmul.mubr.f32.gmra.mrb[0].mxu0 %v118
  %v393 = vpop.f32.mrb[0].mxu0
  %v394 = vadd.f32 %v86, %v393
  %v395 = vpop.f32.mrb[0].mxu0
  %v396 = vadd.f32 %v90, %v395
  %397 = vmatprep.mubr.f32.mxu0 0.0
  %398 = vmatmul.mubr.f32.gmra.mrb[0].mxu0 %v121
  %v399 = vpop.f32.mrb[0].mxu0
  %v400 = vadd.f32 %v86, %v399
  %v401 = vpop.f32.mrb[0].mxu0
  %v402 = vadd.f32 %v90, %v401
  %403 = vmatprep.mubr.f32.mxu0 0.0
  %404 = vmatmul.mubr.f32.gmra.mrb[0].mxu0 %v124
  %v405 = vpop.f32.mrb[0].mxu0
  %v406 = vadd.f32 %v86, %v405
  %v407 = vpop.f32.mrb[0].mxu0
  %v408 = vadd.f32 %v90, %v407
  %409 = vmatprep.mubr.f32.mxu0 0.0
  %410 = vmatmul.mubr.f32.gmra.mrb[0].mxu0 %v127
  %v411 = vpop.f32.mrb[0].mxu0
  %v412 = vadd.f32 %v86, %v411
  %v413 = vpop.f32.mrb[0].mxu0
  %v414 = vadd.f32 %v90, %v413
  %415 = vmatprep.mubr.f32.mxu0 0.0
  %416 = vmatmul.mubr.f32.gmra.mrb[0].mxu0 %v130
  %v417 = vpop.f32.mrb[0].mxu0
  %v418 = vadd.f32 %v86, %v417
  %v419 = vpop.f32.mrb[0].mxu0
  %v420 = vadd.f32 %v90, %v419
  %421 = vmatprep.mubr.f32.mxu0 0.0
  %422 = vmatmul.mubr.f32.gmra.mrb[0].mxu0 %v133
  %v423 = vpop.f32.mrb[0].mxu0
  %v424 = vadd.f32 %v86, %v423
  %v425 = vpop.f32.mrb[0].mxu0
  %v426 = vadd.f32 %v90, %v425
  %427 = vmatprep.mubr.f32.mxu0 0.0
  %428 = vmatmul.mubr.f32.gmra.mrb[0].mxu0 %v136
  %v429 = vpop.f32.mrb[0].mxu0
  %v430 = vadd.f32 %v86, %v429
  %v431 = vpop.f32.mrb[0].mxu0
  %v432 = vadd.f32 %v90, %v431
  %433 = vmatprep.mubr.f32.mxu0 0.0
  %434 = vmatmul.mubr.f32.gmra.mrb[0].mxu0 %v139
  %v435 = vpop.f32.mrb[0].mxu0
  %v436 = vadd.f32 %v86, %v435
  %v437 = vpop.f32.mrb[0].mxu0
  %v438 = vadd.f32 %v90, %v437
  %439 = vmatprep.mubr.f32.mxu0 0.0
  %440 = vmatmul.mubr.f32.gmra.mrb[0].mxu0 %v142
  %v441 = vpop.f32.mrb[0].mxu0
  %v442 = vadd.f32 %v86, %v441
  %v443 = vpop.f32.mrb[0].mxu0
  %v444 = vadd.f32 %v90, %v443
  %445 = vmatprep.mubr.f32.mxu0 0.0
  %446 = vmatmul.mubr.f32.gmra.mrb[0].mxu0 %v145
  %v447 = vpop.f32.mrb[0].mxu0
  %v448 = vadd.f32 %v86, %v447
  %v449 = vpop.f32.mrb[0].mxu0
  %v450 = vadd.f32 %v90, %v449
  %451 = vmatprep.mubr.f32.mxu0 0.0
  %452 = vmatmul.mubr.f32.gmra.mrb[0].mxu0 %v148
  %v453 = vpop.f32.mrb[0].mxu0
  %v454 = vadd.f32 %v86, %v453
  %v455 = vpop.f32.mrb[0].mxu0
  %v456 = vadd.f32 %v90, %v455
  %457 = vmatprep.mubr.f32.mxu0 0.0
  %458 = vmatmul.mubr.f32.gmra.mrb[0].mxu0 %v151
  %v459 = vpop.f32.mrb[0].mxu0
  %v460 = vadd.f32 %v86, %v459
  %v461 = vpop.f32.mrb[0].mxu0
  %v462 = vadd.f32 %v90, %v461
  %463 = vmatprep.mubr.f32.mxu0 0.0
  %464 = vmatmul.mubr.f32.gmra.mrb[0].mxu0 %v154
  %v465 = vpop.f32.mrb[0].mxu0
  %v466 = vadd.f32 %v86, %v465
  %v467 = vpop.f32.mrb[0].mxu0
  %v468 = vadd.f32 %v90, %v467
  %469 = vmatprep.mubr.f32.mxu0 0.0
  %470 = vmatmul.mubr.f32.gmra.mrb[0].mxu0 %v157
  %v471 = vpop.f32.mrb[0].mxu0
  %v472 = vadd.f32 %v86, %v471
  %v473 = vpop.f32.mrb[0].mxu0
  %v474 = vadd.f32 %v90, %v473
  %475 = vmatprep.mubr.f32.mxu0 0.0
  %476 = vmatmul.mubr.f32.gmra.mrb[0].mxu0 %v160
  %v477 = vpop.f32.mrb[0].mxu0
  %v478 = vadd.f32 %v86, %v477
  %v479 = vpop.f32.mrb[0].mxu0
  %v480 = vadd.f32 %v90, %v479
  %481 = vmatprep.mubr.f32.mxu0 0.0
  %482 = vmatmul.mubr.f32.gmra.mrb[0].mxu0 %v163
  %v483 = vpop.f32.mrb[0].mxu0
  %v484 = vadd.f32 %v86, %v483
  %v485 = vpop.f32.mrb[0].mxu0
  %v486 = vadd.f32 %v90, %v485
  %487 = vmatprep.mubr.f32.mxu0 0.0
  %488 = vmatmul.mubr.f32.gmra.mrb[0].mxu0 %v166
  %v489 = vpop.f32.mrb[0].mxu0
  %v490 = vadd.f32 %v86, %v489
  %v491 = vpop.f32.mrb[0].mxu0
  %v492 = vadd.f32 %v90, %v491
  %493 = vmatprep.mubr.f32.mxu0 0.0
  %494 = vmatmul.mubr.f32.gmra.mrb[0].mxu0 %v169
  %v495 = vpop.f32.mrb[0].mxu0
  %v496 = vadd.f32 %v86, %v495
  %v497 = vpop.f32.mrb[0].mxu0
  %v498 = vadd.f32 %v90, %v497
  %499 = vmatprep.mubr.f32.mxu0 0.0
  %500 = vmatmul.mubr.f32.gmra.mrb[0].mxu0 %v172
  %v501 = vpop.f32.mrb[0].mxu0
  %v502 = vadd.f32 %v86, %v501
  %v503 = vpop.f32.mrb[0].mxu0
  %v504 = vadd.f32 %v90, %v503
  %505 = vmatprep.mubr.f32.mxu0 0.0
  %506 = vmatmul.mubr.f32.gmra.mrb[0].mxu0 %v175
  %v507 = vpop.f32.mrb[0].mxu0
  %v508 = vadd.f32 %v86, %v507
  %v509 = vpop.f32.mrb[0].mxu0
  %v510 = vadd.f32 %v90, %v509
  %511 = vmatprep.mubr.f32.mxu0 0.0
  %512 = vmatmul.mubr.f32.gmra.mrb[0].mxu0 %v178
  %v513 = vpop.f32.mrb[0].mxu0
  %v514 = vadd.f32 %v86, %v513
  %v515 = vpop.f32.mrb[0].mxu0
  %v516 = vadd.f32 %v90, %v515
  %517 = vmatprep.mubr.f32.mxu0 0.0
  %518 = vmatmul.mubr.f32.gmra.mrb[0].mxu0 %v181
  %v519 = vpop.f32.mrb[0].mxu0
  %v520 = vadd.f32 %v86, %v519
  %v521 = vpop.f32.mrb[0].mxu0
  %v522 = vadd.f32 %v90, %v521
  %523 = vmatprep.mubr.f32.mxu0 0.0
  %524 = vmatmul.mubr.f32.gmra.mrb[0].mxu0 %v184
  %v525 = vpop.f32.mrb[0].mxu0
  %v526 = vadd.f32 %v86, %v525
  %v527 = vpop.f32.mrb[0].mxu0
  %v528 = vadd.f32 %v90, %v527
  %529 = vmatprep.mubr.f32.mxu0 0.0
  %530 = vmatmul.mubr.f32.gmra.mrb[0].mxu0 %v187
  %v531 = vpop.f32.mrb[0].mxu0
  %v532 = vadd.f32 %v86, %v531
  %v533 = vpop.f32.mrb[0].mxu0
  %v534 = vadd.f32 %v90, %v533
  %535 = vmatprep.mubr.f32.mxu0 0.0
  %536 = vmatmul.mubr.f32.gmra.mrb[0].mxu0 %v190
  %v537 = vpop.f32.mrb[0].mxu0
  %v538 = vadd.f32 %v86, %v537
  %v539 = vpop.f32.mrb[0].mxu0
  %v540 = vadd.f32 %v90, %v539
  %541 = vmatprep.mubr.f32.mxu0 0.0
  %542 = vmatmul.mubr.f32.gmra.mrb[0].mxu0 %v193
  %v543 = vpop.f32.mrb[0].mxu0
  %v544 = vadd.f32 %v86, %v543
  %v545 = vpop.f32.mrb[0].mxu0
  %v546 = vadd.f32 %v90, %v545
  %547 = vmatprep.mubr.f32.mxu0 0.0
  %548 = vmatmul.mubr.f32.gmra.mrb[0].mxu0 %v196
  %v549 = vpop.f32.mrb[0].mxu0
  %v550 = vadd.f32 %v86, %v549
  %v551 = vpop.f32.mrb[0].mxu0
  %v552 = vadd.f32 %v90, %v551
  %553 = vmatprep.mubr.f32.mxu0 0.0
  %554 = vmatmul.mubr.f32.gmra.mrb[0].mxu0 %v199
  %v555 = vpop.f32.mrb[0].mxu0
  %v556 = vadd.f32 %v86, %v555
  %v557 = vpop.f32.mrb[0].mxu0
  %v558 = vadd.f32 %v90, %v557
  %559 = vmatprep.mubr.f32.mxu0 0.0
  %560 = vmatmul.mubr.f32.gmra.mrb[0].mxu0 %v202
  %v561 = vpop.f32.mrb[0].mxu0
  %v562 = vadd.f32 %v86, %v561
  %v563 = vpop.f32.mrb[0].mxu0
  %v564 = vadd.f32 %v90, %v563
  %565 = vmatprep.mubr.f32.mxu0 0.0
  %566 = vmatmul.mubr.f32.gmra.mrb[0].mxu0 %v205
  %v567 = vpop.f32.mrb[0].mxu0
  %v568 = vadd.f32 %v86, %v567
  %v569 = vpop.f32.mrb[0].mxu0
  %v570 = vadd.f32 %v90, %v569
  %571 = vmatprep.mubr.f32.mxu0 0.0
  %572 = vmatmul.mubr.f32.gmra.mrb[0].mxu0 %v208
  %v573 = vpop.f32.mrb[0].mxu0
  %v574 = vadd.f32 %v86, %v573
  %v575 = vpop.f32.mrb[0].mxu0
  %v576 = vadd.f32 %v90, %v575
  %577 = vmatprep.mubr.f32.mxu0 0.0
  %578 = vmatmul.mubr.f32.gmra.mrb[0].mxu0 %v211
  %v579 = vpop.f32.mrb[0].mxu0
  %v580 = vadd.f32 %v86, %v579
  %v581 = vpop.f32.mrb[0].mxu0
  %v582 = vadd.f32 %v90, %v581
  %583 = vmatprep.mubr.f32.mxu0 0.0
  %584 = vmatmul.mubr.f32.gmra.mrb[0].mxu0 %v214
  %v585 = vpop.f32.mrb[0].mxu0
  %v586 = vadd.f32 %v86, %v585
  %v587 = vpop.f32.mrb[0].mxu0
  %v588 = vadd.f32 %v90, %v587
  %589 = vmatprep.mubr.f32.mxu0 0.0
  %590 = vmatmul.mubr.f32.gmra.mrb[0].mxu0 %v217
  %v591 = vpop.f32.mrb[0].mxu0
  %v592 = vadd.f32 %v86, %v591
  %v593 = vpop.f32.mrb[0].mxu0
  %v594 = vadd.f32 %v90, %v593
  %595 = vmatprep.mubr.f32.mxu0 0.0
  %596 = vmatmul.mubr.f32.gmra.mrb[0].mxu0 %v220
  %v597 = vpop.f32.mrb[0].mxu0
  %v598 = vadd.f32 %v86, %v597
  %v599 = vpop.f32.mrb[0].mxu0
  %v600 = vadd.f32 %v90, %v599
  %601 = vmatprep.mubr.f32.mxu0 0.0
  %602 = vmatmul.mubr.f32.gmra.mrb[0].mxu0 %v223
  %v603 = vpop.f32.mrb[0].mxu0
  %v604 = vadd.f32 %v86, %v603
  %v605 = vpop.f32.mrb[0].mxu0
  %v606 = vadd.f32 %v90, %v605
  %607 = vmatprep.mubr.f32.mxu0 0.0
  %608 = vmatmul.mubr.f32.gmra.mrb[0].mxu0 %v226
  %v609 = vpop.f32.mrb[0].mxu0
  %v610 = vadd.f32 %v86, %v609
  %v611 = vpop.f32.mrb[0].mxu0
  %v612 = vadd.f32 %v90, %v611
  %613 = vmatprep.mubr.f32.mxu0 0.0
  %614 = vmatmul.mubr.f32.gmra.mrb[0].mxu0 %v229
  %v615 = vpop.f32.mrb[0].mxu0
  %v616 = vadd.f32 %v86, %v615
  %v617 = vpop.f32.mrb[0].mxu0
  %v618 = vadd.f32 %v90, %v617
  %619 = vmatprep.mubr.f32.mxu0 0.0
  %620 = vmatmul.mubr.f32.gmra.mrb[0].mxu0 %v232
  %v621 = vpop.f32.mrb[0].mxu0
  %v622 = vadd.f32 %v86, %v621
  %v623 = vpop.f32.mrb[0].mxu0
  %v624 = vadd.f32 %v90, %v623
  %625 = vmatprep.mubr.f32.mxu0 0.0
  %626 = vmatmul.mubr.f32.gmra.mrb[0].mxu0 %v235
  %v627 = vpop.f32.mrb[0].mxu0
  %v628 = vadd.f32 %v86, %v627
  %v629 = vpop.f32.mrb[0].mxu0
  %v630 = vadd.f32 %v90, %v629
  %631 = vmatprep.mubr.f32.mxu0 0.0
  %632 = vmatmul.mubr.f32.gmra.mrb[0].mxu0 %v238
  %v633 = vpop.f32.mrb[0].mxu0
  %v634 = vadd.f32 %v86, %v633
  %v635 = vpop.f32.mrb[0].mxu0
  %v636 = vadd.f32 %v90, %v635
  %637 = vmatprep.mubr.f32.mxu0 0.0
  %638 = vmatmul.mubr.f32.gmra.mrb[0].mxu0 %v241
  %v639 = vpop.f32.mrb[0].mxu0
  %v640 = vadd.f32 %v86, %v639
  %v641 = vpop.f32.mrb[0].mxu0
  %v642 = vadd.f32 %v90, %v641
  %643 = vmatprep.mubr.f32.mxu0 0.0
  %644 = vmatmul.mubr.f32.gmra.mrb[0].mxu0 %v244
  %v645 = vpop.f32.mrb[0].mxu0
  %v646 = vadd.f32 %v86, %v645
  %v647 = vpop.f32.mrb[0].mxu0
  %v648 = vadd.f32 %v90, %v647
  %649 = vmatprep.mubr.f32.mxu0 0.0
  %650 = vmatmul.mubr.f32.gmra.mrb[0].mxu0 %v247
  %v651 = vpop.f32.mrb[0].mxu0
  %v652 = vadd.f32 %v86, %v651
  %v653 = vpop.f32.mrb[0].mxu0
  %v654 = vadd.f32 %v90, %v653
  %655 = vmatprep.mubr.f32.mxu0 0.0
  %656 = vmatmul.mubr.f32.gmra.mrb[0].mxu0 %v250
  %v657 = vpop.f32.mrb[0].mxu0
  %v658 = vadd.f32 %v86, %v657
  %v659 = vpop.f32.mrb[0].mxu0
  %v660 = vadd.f32 %v90, %v659
  %661 = vmatprep.mubr.f32.mxu0 0.0
  %662 = vmatmul.mubr.f32.gmra.mrb[0].mxu0 %v253
  %v663 = vpop.f32.mrb[0].mxu0
  %v664 = vadd.f32 %v86, %v663
  %v665 = vpop.f32.mrb[0].mxu0
  %v666 = vadd.f32 %v90, %v665
  %667 = vmatprep.mubr.f32.mxu0 0.0
  %668 = vmatmul.mubr.f32.gmra.mrb[0].mxu0 %v256
  %v669 = vpop.f32.mrb[0].mxu0
  %v670 = vadd.f32 %v86, %v669
  %v671 = vpop.f32.mrb[0].mxu0
  %v672 = vadd.f32 %v90, %v671
  %673 = vmatprep.mubr.f32.mxu0 0.0
  %674 = vmatmul.mubr.f32.gmra.mrb[0].mxu0 %v259
  %v675 = vpop.f32.mrb[0].mxu0
  %v676 = vadd.f32 %v86, %v675
  %v677 = vpop.f32.mrb[0].mxu0
  %v678 = vadd.f32 %v90, %v677
  %679 = vmatprep.mubr.f32.mxu0 0.0
  %680 = vmatmul.mubr.f32.gmra.mrb[0].mxu0 %v262
  %v681 = vpop.f32.mrb[0].mxu0
  %v682 = vadd.f32 %v86, %v681
  %v683 = vpop.f32.mrb[0].mxu0
  %v684 = vadd.f32 %v90, %v683
  %685 = vmatprep.mubr.f32.mxu0 0.0
  %686 = vmatmul.mubr.f32.gmra.mrb[0].mxu0 %v265
  %v687 = vpop.f32.mrb[0].mxu0
  %v688 = vadd.f32 %v86, %v687
  %v689 = vpop.f32.mrb[0].mxu0
  %v690 = vadd.f32 %v90, %v689
  %691 = vmatprep.mubr.f32.mxu0 0.0
  %692 = vmatmul.mubr.f32.gmra.mrb[0].mxu0 %v268
  %v693 = vpop.f32.mrb[0].mxu0
  %v694 = vadd.f32 %v86, %v693
  %v695 = vpop.f32.mrb[0].mxu0
  %v696 = vadd.f32 %v90, %v695
  %697 = vmatprep.mubr.f32.mxu0 0.0
  %698 = vmatmul.mubr.f32.gmra.mrb[0].mxu0 %v271
  %v699 = vpop.f32.mrb[0].mxu0
  %v700 = vadd.f32 %v86, %v699
  %v701 = vpop.f32.mrb[0].mxu0
  %v702 = vadd.f32 %v90, %v701
  %703 = vmatprep.mubr.f32.mxu0 0.0
  %704 = vmatmul.mubr.f32.gmra.mrb[0].mxu0 %v274
  %v705 = vpop.f32.mrb[0].mxu0
  %v706 = vadd.f32 %v86, %v705
  %v707 = vpop.f32.mrb[0].mxu0
  %v708 = vadd.f32 %v90, %v707
  %709 = vmatprep.mubr.f32.mxu0 0.0
  %710 = vmatmul.mubr.f32.gmra.mrb[0].mxu0 %v277
  %v711 = vpop.f32.mrb[0].mxu0
  %v712 = vadd.f32 %v86, %v711
  %v713 = vpop.f32.mrb[0].mxu0
  %v714 = vadd.f32 %v90, %v713
  %715 = vmatprep.mubr.f32.mxu0 0.0
  %716 = vmatmul.mubr.f32.gmra.mrb[0].mxu0 %v280
  %v717 = vpop.f32.mrb[0].mxu0
  %v718 = vadd.f32 %v86, %v717
  %v719 = vpop.f32.mrb[0].mxu0
  %v720 = vadd.f32 %v90, %v719
  %721 = vmatprep.mubr.f32.mxu0 0.0
  %722 = vmatmul.mubr.f32.gmra.mrb[0].mxu0 %v283
  %v723 = vpop.f32.mrb[0].mxu0
  %v724 = vadd.f32 %v86, %v723
  %v725 = vpop.f32.mrb[0].mxu0
  %v726 = vadd.f32 %v90, %v725
  %727 = vmatprep.mubr.f32.mxu0 0.0
  %728 = vmatmul.mubr.f32.gmra.mrb[0].mxu0 %v286
  %v729 = vpop.f32.mrb[0].mxu0
  %v730 = vadd.f32 %v86, %v729
  %v731 = vpop.f32.mrb[0].mxu0
  %v732 = vadd.f32 %v90, %v731
  %733 = vmatprep.mubr.f32.mxu0 0.0
  %734 = vmatmul.mubr.f32.gmra.mrb[0].mxu0 %v289
  %v735 = vpop.f32.mrb[0].mxu0
  %v736 = vadd.f32 %v86, %v735
  %v737 = vpop.f32.mrb[0].mxu0
  %v738 = vadd.f32 %v90, %v737
  %739 = vdwg.mxu0
  %740 = vmatprep.subr.mxu0 0.0
  %741 = vmatpush1.msra.mxu0 %v80
  %742 = vmatprep.subr.mxu0 0.0
  %743 = vmatpush1.msra.mxu0 0.0
  %744 = vmatprep.subr.mxu0 0.0
  %745 = vmatpush1.msra.mxu0 0.0
  %746 = vmatprep.subr.mxu0 0.0
  %747 = vmatpush1.msra.mxu0 0.0
  %748 = vmatprep.subr.mxu0 0.0
  %749 = vmatpush1.msra.mxu0 0.0
  %750 = vmatprep.subr.mxu0 0.0
  %751 = vmatpush1.msra.mxu0 0.0
  %752 = vmatprep.subr.mxu0 0.0
  %753 = vmatpush1.msra.mxu0 0.0
  %754 = vmatprep.subr.mxu0 0.0
  %755 = vmatpush1.msra.mxu0 0.0
  %756 = vmatprep.subr.mxu0 0.0
  %757 = vmatpush1.msra.mxu0 0.0
  %758 = vmatprep.subr.mxu0 0.0
  %759 = vmatpush1.msra.mxu0 0.0
  %760 = vmatprep.subr.mxu0 0.0
  %761 = vmatpush1.msra.mxu0 0.0
  %762 = vmatprep.subr.mxu0 0.0
  %763 = vmatpush1.msra.mxu0 0.0
  %764 = vmatprep.subr.mxu0 0.0
  %765 = vmatpush1.msra.mxu0 0.0
  %766 = vmatprep.subr.mxu0 0.0
  %767 = vmatpush1.msra.mxu0 0.0
  %768 = vmatprep.subr.mxu0 0.0
  %769 = vmatpush1.msra.mxu0 0.0
  %770 = vmatprep.subr.mxu0 0.0
  %771 = vmatpush1.msra.mxu0 0.0
  %772 = vmatprep.subr.mxu0 0.0
  %773 = vmatpush1.msra.mxu0 0.0
  %774 = vmatprep.subr.mxu0 0.0
  %775 = vmatpush1.msra.mxu0 0.0
  %776 = vmatprep.subr.mxu0 0.0
  %777 = vmatpush1.msra.mxu0 0.0
  %778 = vmatprep.subr.mxu0 0.0
  %779 = vmatpush1.msra.mxu0 0.0
  %780 = vmatprep.subr.mxu0 0.0
  %781 = vmatpush1.msra.mxu0 0.0
  %782 = vmatprep.subr.mxu0 0.0
  %783 = vmatpush1.msra.mxu0 0.0
  %784 = vmatprep.subr.mxu0 0.0
  %785 = vmatpush1.msra.mxu0 0.0
  %786 = vmatprep.subr.mxu0 0.0
  %787 = vmatpush1.msra.mxu0 0.0
  %788 = vmatprep.subr.mxu0 0.0
  %789 = vmatpush1.msra.mxu0 0.0
  %790 = vmatprep.subr.mxu0 0.0
  %791 = vmatpush1.msra.mxu0 0.0
  %792 = vmatprep.subr.mxu0 0.0
  %793 = vmatpush1.msra.mxu0 0.0
  %794 = vmatprep.subr.mxu0 0.0
  %795 = vmatpush1.msra.mxu0 0.0
  %796 = vmatprep.subr.mxu0 0.0
  %797 = vmatpush1.msra.mxu0 0.0
  %798 = vmatprep.subr.mxu0 0.0
  %799 = vmatpush1.msra.mxu0 0.0
  %800 = vmatprep.subr.mxu0 0.0
  %801 = vmatpush1.msra.mxu0 0.0
  %802 = vmatprep.subr.mxu0 0.0
  %803 = vmatpush1.msra.mxu0 0.0
  %804 = vmatprep.mubr.f32.mxu0 0.0
  %805 = vmatmul.mubr.f32.gmra.mrb[0].mxu0 %v100
  %v806 = vpop.f32.mrb[0].mxu0
  %v807 = vadd.f32 %v94, %v806
  %v808 = vpop.f32.mrb[0].mxu0
  %809 = vmatprep.mubr.f32.mxu0 0.0
  %810 = vmatmul.mubr.f32.gmra.mrb[0].mxu0 %v103
  %v811 = vpop.f32.mrb[0].mxu0
  %v812 = vadd.f32 %v94, %v811
  %v813 = vpop.f32.mrb[0].mxu0
  %814 = vmatprep.mubr.f32.mxu0 0.0
  %815 = vmatmul.mubr.f32.gmra.mrb[0].mxu0 %v106
  %v816 = vpop.f32.mrb[0].mxu0
  %v817 = vadd.f32 %v94, %v816
  %v818 = vpop.f32.mrb[0].mxu0
  %819 = vmatprep.mubr.f32.mxu0 0.0
  %820 = vmatmul.mubr.f32.gmra.mrb[0].mxu0 %v109
  %v821 = vpop.f32.mrb[0].mxu0
  %v822 = vadd.f32 %v94, %v821
  %v823 = vpop.f32.mrb[0].mxu0
  %824 = vmatprep.mubr.f32.mxu0 0.0
  %825 = vmatmul.mubr.f32.gmra.mrb[0].mxu0 %v112
  %v826 = vpop.f32.mrb[0].mxu0
  %v827 = vadd.f32 %v94, %v826
  %v828 = vpop.f32.mrb[0].mxu0
  %829 = vmatprep.mubr.f32.mxu0 0.0
  %830 = vmatmul.mubr.f32.gmra.mrb[0].mxu0 %v115
  %v831 = vpop.f32.mrb[0].mxu0
  %v832 = vadd.f32 %v94, %v831
  %v833 = vpop.f32.mrb[0].mxu0
  %834 = vmatprep.mubr.f32.mxu0 0.0
  %835 = vmatmul.mubr.f32.gmra.mrb[0].mxu0 %v118
  %v836 = vpop.f32.mrb[0].mxu0
  %v837 = vadd.f32 %v94, %v836
  %v838 = vpop.f32.mrb[0].mxu0
  %839 = vmatprep.mubr.f32.mxu0 0.0
  %840 = vmatmul.mubr.f32.gmra.mrb[0].mxu0 %v121
  %v841 = vpop.f32.mrb[0].mxu0
  %v842 = vadd.f32 %v94, %v841
  %v843 = vpop.f32.mrb[0].mxu0
  %844 = vmatprep.mubr.f32.mxu0 0.0
  %845 = vmatmul.mubr.f32.gmra.mrb[0].mxu0 %v124
  %v846 = vpop.f32.mrb[0].mxu0
  %v847 = vadd.f32 %v94, %v846
  %v848 = vpop.f32.mrb[0].mxu0
  %849 = vmatprep.mubr.f32.mxu0 0.0
  %850 = vmatmul.mubr.f32.gmra.mrb[0].mxu0 %v127
  %v851 = vpop.f32.mrb[0].mxu0
  %v852 = vadd.f32 %v94, %v851
  %v853 = vpop.f32.mrb[0].mxu0
  %854 = vmatprep.mubr.f32.mxu0 0.0
  %855 = vmatmul.mubr.f32.gmra.mrb[0].mxu0 %v130
  %v856 = vpop.f32.mrb[0].mxu0
  %v857 = vadd.f32 %v94, %v856
  %v858 = vpop.f32.mrb[0].mxu0
  %859 = vmatprep.mubr.f32.mxu0 0.0
  %860 = vmatmul.mubr.f32.gmra.mrb[0].mxu0 %v133
  %v861 = vpop.f32.mrb[0].mxu0
  %v862 = vadd.f32 %v94, %v861
  %v863 = vpop.f32.mrb[0].mxu0
  %864 = vmatprep.mubr.f32.mxu0 0.0
  %865 = vmatmul.mubr.f32.gmra.mrb[0].mxu0 %v136
  %v866 = vpop.f32.mrb[0].mxu0
  %v867 = vadd.f32 %v94, %v866
  %v868 = vpop.f32.mrb[0].mxu0
  %869 = vmatprep.mubr.f32.mxu0 0.0
  %870 = vmatmul.mubr.f32.gmra.mrb[0].mxu0 %v139
  %v871 = vpop.f32.mrb[0].mxu0
  %v872 = vadd.f32 %v94, %v871
  %v873 = vpop.f32.mrb[0].mxu0
  %874 = vmatprep.mubr.f32.mxu0 0.0
  %875 = vmatmul.mubr.f32.gmra.mrb[0].mxu0 %v142
  %v876 = vpop.f32.mrb[0].mxu0
  %v877 = vadd.f32 %v94, %v876
  %v878 = vpop.f32.mrb[0].mxu0
  %879 = vmatprep.mubr.f32.mxu0 0.0
  %880 = vmatmul.mubr.f32.gmra.mrb[0].mxu0 %v145
  %v881 = vpop.f32.mrb[0].mxu0
  %v882 = vadd.f32 %v94, %v881
  %v883 = vpop.f32.mrb[0].mxu0
  %884 = vmatprep.mubr.f32.mxu0 0.0
  %885 = vmatmul.mubr.f32.gmra.mrb[0].mxu0 %v148
  %v886 = vpop.f32.mrb[0].mxu0
  %v887 = vadd.f32 %v94, %v886
  %v888 = vpop.f32.mrb[0].mxu0
  %889 = vmatprep.mubr.f32.mxu0 0.0
  %890 = vmatmul.mubr.f32.gmra.mrb[0].mxu0 %v151
  %v891 = vpop.f32.mrb[0].mxu0
  %v892 = vadd.f32 %v94, %v891
  %v893 = vpop.f32.mrb[0].mxu0
  %894 = vmatprep.mubr.f32.mxu0 0.0
  %895 = vmatmul.mubr.f32.gmra.mrb[0].mxu0 %v154
  %v896 = vpop.f32.mrb[0].mxu0
  %v897 = vadd.f32 %v94, %v896
  %v898 = vpop.f32.mrb[0].mxu0
  %899 = vmatprep.mubr.f32.mxu0 0.0
  %900 = vmatmul.mubr.f32.gmra.mrb[0].mxu0 %v157
  %v901 = vpop.f32.mrb[0].mxu0
  %v902 = vadd.f32 %v94, %v901
  %v903 = vpop.f32.mrb[0].mxu0
  %904 = vmatprep.mubr.f32.mxu0 0.0
  %905 = vmatmul.mubr.f32.gmra.mrb[0].mxu0 %v160
  %v906 = vpop.f32.mrb[0].mxu0
  %v907 = vadd.f32 %v94, %v906
  %v908 = vpop.f32.mrb[0].mxu0
  %909 = vmatprep.mubr.f32.mxu0 0.0
  %910 = vmatmul.mubr.f32.gmra.mrb[0].mxu0 %v163
  %v911 = vpop.f32.mrb[0].mxu0
  %v912 = vadd.f32 %v94, %v911
  %v913 = vpop.f32.mrb[0].mxu0
  %914 = vmatprep.mubr.f32.mxu0 0.0
  %915 = vmatmul.mubr.f32.gmra.mrb[0].mxu0 %v166
  %v916 = vpop.f32.mrb[0].mxu0
  %v917 = vadd.f32 %v94, %v916
  %v918 = vpop.f32.mrb[0].mxu0
  %919 = vmatprep.mubr.f32.mxu0 0.0
  %920 = vmatmul.mubr.f32.gmra.mrb[0].mxu0 %v169
  %v921 = vpop.f32.mrb[0].mxu0
  %v922 = vadd.f32 %v94, %v921
  %v923 = vpop.f32.mrb[0].mxu0
  %924 = vmatprep.mubr.f32.mxu0 0.0
  %925 = vmatmul.mubr.f32.gmra.mrb[0].mxu0 %v172
  %v926 = vpop.f32.mrb[0].mxu0
  %v927 = vadd.f32 %v94, %v926
  %v928 = vpop.f32.mrb[0].mxu0
  %929 = vmatprep.mubr.f32.mxu0 0.0
  %930 = vmatmul.mubr.f32.gmra.mrb[0].mxu0 %v175
  %v931 = vpop.f32.mrb[0].mxu0
  %v932 = vadd.f32 %v94, %v931
  %v933 = vpop.f32.mrb[0].mxu0
  %934 = vmatprep.mubr.f32.mxu0 0.0
  %935 = vmatmul.mubr.f32.gmra.mrb[0].mxu0 %v178
  %v936 = vpop.f32.mrb[0].mxu0
  %v937 = vadd.f32 %v94, %v936
  %v938 = vpop.f32.mrb[0].mxu0
  %939 = vmatprep.mubr.f32.mxu0 0.0
  %940 = vmatmul.mubr.f32.gmra.mrb[0].mxu0 %v181
  %v941 = vpop.f32.mrb[0].mxu0
  %v942 = vadd.f32 %v94, %v941
  %v943 = vpop.f32.mrb[0].mxu0
  %944 = vmatprep.mubr.f32.mxu0 0.0
  %945 = vmatmul.mubr.f32.gmra.mrb[0].mxu0 %v184
  %v946 = vpop.f32.mrb[0].mxu0
  %v947 = vadd.f32 %v94, %v946
  %v948 = vpop.f32.mrb[0].mxu0
  %949 = vmatprep.mubr.f32.mxu0 0.0
  %950 = vmatmul.mubr.f32.gmra.mrb[0].mxu0 %v187
  %v951 = vpop.f32.mrb[0].mxu0
  %v952 = vadd.f32 %v94, %v951
  %v953 = vpop.f32.mrb[0].mxu0
  %954 = vmatprep.mubr.f32.mxu0 0.0
  %955 = vmatmul.mubr.f32.gmra.mrb[0].mxu0 %v190
  %v956 = vpop.f32.mrb[0].mxu0
  %v957 = vadd.f32 %v94, %v956
  %v958 = vpop.f32.mrb[0].mxu0
  %959 = vmatprep.mubr.f32.mxu0 0.0
  %960 = vmatmul.mubr.f32.gmra.mrb[0].mxu0 %v193
  %v961 = vpop.f32.mrb[0].mxu0
  %v962 = vadd.f32 %v94, %v961
  %v963 = vpop.f32.mrb[0].mxu0
  %964 = vmatprep.mubr.f32.mxu0 0.0
  %965 = vmatmul.mubr.f32.gmra.mrb[0].mxu0 %v196
  %v966 = vpop.f32.mrb[0].mxu0
  %v967 = vadd.f32 %v94, %v966
  %v968 = vpop.f32.mrb[0].mxu0
  %969 = vmatprep.mubr.f32.mxu0 0.0
  %970 = vmatmul.mubr.f32.gmra.mrb[0].mxu0 %v199
  %v971 = vpop.f32.mrb[0].mxu0
  %v972 = vadd.f32 %v94, %v971
  %v973 = vpop.f32.mrb[0].mxu0
  %974 = vmatprep.mubr.f32.mxu0 0.0
  %975 = vmatmul.mubr.f32.gmra.mrb[0].mxu0 %v202
  %v976 = vpop.f32.mrb[0].mxu0
  %v977 = vadd.f32 %v94, %v976
  %v978 = vpop.f32.mrb[0].mxu0
  %979 = vmatprep.mubr.f32.mxu0 0.0
  %980 = vmatmul.mubr.f32.gmra.mrb[0].mxu0 %v205
  %v981 = vpop.f32.mrb[0].mxu0
  %v982 = vadd.f32 %v94, %v981
  %v983 = vpop.f32.mrb[0].mxu0
  %984 = vmatprep.mubr.f32.mxu0 0.0
  %985 = vmatmul.mubr.f32.gmra.mrb[0].mxu0 %v208
  %v986 = vpop.f32.mrb[0].mxu0
  %v987 = vadd.f32 %v94, %v986
  %v988 = vpop.f32.mrb[0].mxu0
  %989 = vmatprep.mubr.f32.mxu0 0.0
  %990 = vmatmul.mubr.f32.gmra.mrb[0].mxu0 %v211
  %v991 = vpop.f32.mrb[0].mxu0
  %v992 = vadd.f32 %v94, %v991
  %v993 = vpop.f32.mrb[0].mxu0
  %994 = vmatprep.mubr.f32.mxu0 0.0
  %995 = vmatmul.mubr.f32.gmra.mrb[0].mxu0 %v214
  %v996 = vpop.f32.mrb[0].mxu0
  %v997 = vadd.f32 %v94, %v996
  %v998 = vpop.f32.mrb[0].mxu0
  %999 = vmatprep.mubr.f32.mxu0 0.0
  %1000 = vmatmul.mubr.f32.gmra.mrb[0].mxu0 %v217
  %v1001 = vpop.f32.mrb[0].mxu0
  %v1002 = vadd.f32 %v94, %v1001
  %v1003 = vpop.f32.mrb[0].mxu0
  %1004 = vmatprep.mubr.f32.mxu0 0.0
  %1005 = vmatmul.mubr.f32.gmra.mrb[0].mxu0 %v220
  %v1006 = vpop.f32.mrb[0].mxu0
  %v1007 = vadd.f32 %v94, %v1006
  %v1008 = vpop.f32.mrb[0].mxu0
  %1009 = vmatprep.mubr.f32.mxu0 0.0
  %1010 = vmatmul.mubr.f32.gmra.mrb[0].mxu0 %v223
  %v1011 = vpop.f32.mrb[0].mxu0
  %v1012 = vadd.f32 %v94, %v1011
  %v1013 = vpop.f32.mrb[0].mxu0
  %1014 = vmatprep.mubr.f32.mxu0 0.0
  %1015 = vmatmul.mubr.f32.gmra.mrb[0].mxu0 %v226
  %v1016 = vpop.f32.mrb[0].mxu0
  %v1017 = vadd.f32 %v94, %v1016
  %v1018 = vpop.f32.mrb[0].mxu0
  %1019 = vmatprep.mubr.f32.mxu0 0.0
  %1020 = vmatmul.mubr.f32.gmra.mrb[0].mxu0 %v229
  %v1021 = vpop.f32.mrb[0].mxu0
  %v1022 = vadd.f32 %v94, %v1021
  %v1023 = vpop.f32.mrb[0].mxu0
  %1024 = vmatprep.mubr.f32.mxu0 0.0
  %1025 = vmatmul.mubr.f32.gmra.mrb[0].mxu0 %v232
  %v1026 = vpop.f32.mrb[0].mxu0
  %v1027 = vadd.f32 %v94, %v1026
  %v1028 = vpop.f32.mrb[0].mxu0
  %1029 = vmatprep.mubr.f32.mxu0 0.0
  %1030 = vmatmul.mubr.f32.gmra.mrb[0].mxu0 %v235
  %v1031 = vpop.f32.mrb[0].mxu0
  %v1032 = vadd.f32 %v94, %v1031
  %v1033 = vpop.f32.mrb[0].mxu0
  %1034 = vmatprep.mubr.f32.mxu0 0.0
  %1035 = vmatmul.mubr.f32.gmra.mrb[0].mxu0 %v238
  %v1036 = vpop.f32.mrb[0].mxu0
  %v1037 = vadd.f32 %v94, %v1036
  %v1038 = vpop.f32.mrb[0].mxu0
  %1039 = vmatprep.mubr.f32.mxu0 0.0
  %1040 = vmatmul.mubr.f32.gmra.mrb[0].mxu0 %v241
  %v1041 = vpop.f32.mrb[0].mxu0
  %v1042 = vadd.f32 %v94, %v1041
  %v1043 = vpop.f32.mrb[0].mxu0
  %1044 = vmatprep.mubr.f32.mxu0 0.0
  %1045 = vmatmul.mubr.f32.gmra.mrb[0].mxu0 %v244
  %v1046 = vpop.f32.mrb[0].mxu0
  %v1047 = vadd.f32 %v94, %v1046
  %v1048 = vpop.f32.mrb[0].mxu0
  %1049 = vmatprep.mubr.f32.mxu0 0.0
  %1050 = vmatmul.mubr.f32.gmra.mrb[0].mxu0 %v247
  %v1051 = vpop.f32.mrb[0].mxu0
  %v1052 = vadd.f32 %v94, %v1051
  %v1053 = vpop.f32.mrb[0].mxu0
  %1054 = vmatprep.mubr.f32.mxu0 0.0
  %1055 = vmatmul.mubr.f32.gmra.mrb[0].mxu0 %v250
  %v1056 = vpop.f32.mrb[0].mxu0
  %v1057 = vadd.f32 %v94, %v1056
  %v1058 = vpop.f32.mrb[0].mxu0
  %1059 = vmatprep.mubr.f32.mxu0 0.0
  %1060 = vmatmul.mubr.f32.gmra.mrb[0].mxu0 %v253
  %v1061 = vpop.f32.mrb[0].mxu0
  %v1062 = vadd.f32 %v94, %v1061
  %v1063 = vpop.f32.mrb[0].mxu0
  %1064 = vmatprep.mubr.f32.mxu0 0.0
  %1065 = vmatmul.mubr.f32.gmra.mrb[0].mxu0 %v256
  %v1066 = vpop.f32.mrb[0].mxu0
  %v1067 = vadd.f32 %v94, %v1066
  %v1068 = vpop.f32.mrb[0].mxu0
  %1069 = vmatprep.mubr.f32.mxu0 0.0
  %1070 = vmatmul.mubr.f32.gmra.mrb[0].mxu0 %v259
  %v1071 = vpop.f32.mrb[0].mxu0
  %v1072 = vadd.f32 %v94, %v1071
  %v1073 = vpop.f32.mrb[0].mxu0
  %1074 = vmatprep.mubr.f32.mxu0 0.0
  %1075 = vmatmul.mubr.f32.gmra.mrb[0].mxu0 %v262
  %v1076 = vpop.f32.mrb[0].mxu0
  %v1077 = vadd.f32 %v94, %v1076
  %v1078 = vpop.f32.mrb[0].mxu0
  %1079 = vmatprep.mubr.f32.mxu0 0.0
  %1080 = vmatmul.mubr.f32.gmra.mrb[0].mxu0 %v265
  %v1081 = vpop.f32.mrb[0].mxu0
  %v1082 = vadd.f32 %v94, %v1081
  %v1083 = vpop.f32.mrb[0].mxu0
  %1084 = vmatprep.mubr.f32.mxu0 0.0
  %1085 = vmatmul.mubr.f32.gmra.mrb[0].mxu0 %v268
  %v1086 = vpop.f32.mrb[0].mxu0
  %v1087 = vadd.f32 %v94, %v1086
  %v1088 = vpop.f32.mrb[0].mxu0
  %1089 = vmatprep.mubr.f32.mxu0 0.0
  %1090 = vmatmul.mubr.f32.gmra.mrb[0].mxu0 %v271
  %v1091 = vpop.f32.mrb[0].mxu0
  %v1092 = vadd.f32 %v94, %v1091
  %v1093 = vpop.f32.mrb[0].mxu0
  %1094 = vmatprep.mubr.f32.mxu0 0.0
  %1095 = vmatmul.mubr.f32.gmra.mrb[0].mxu0 %v274
  %v1096 = vpop.f32.mrb[0].mxu0
  %v1097 = vadd.f32 %v94, %v1096
  %v1098 = vpop.f32.mrb[0].mxu0
  %1099 = vmatprep.mubr.f32.mxu0 0.0
  %1100 = vmatmul.mubr.f32.gmra.mrb[0].mxu0 %v277
  %v1101 = vpop.f32.mrb[0].mxu0
  %v1102 = vadd.f32 %v94, %v1101
  %v1103 = vpop.f32.mrb[0].mxu0
  %1104 = vmatprep.mubr.f32.mxu0 0.0
  %1105 = vmatmul.mubr.f32.gmra.mrb[0].mxu0 %v280
  %v1106 = vpop.f32.mrb[0].mxu0
  %v1107 = vadd.f32 %v94, %v1106
  %v1108 = vpop.f32.mrb[0].mxu0
  %1109 = vmatprep.mubr.f32.mxu0 0.0
  %1110 = vmatmul.mubr.f32.gmra.mrb[0].mxu0 %v283
  %v1111 = vpop.f32.mrb[0].mxu0
  %v1112 = vadd.f32 %v94, %v1111
  %v1113 = vpop.f32.mrb[0].mxu0
  %1114 = vmatprep.mubr.f32.mxu0 0.0
  %1115 = vmatmul.mubr.f32.gmra.mrb[0].mxu0 %v286
  %v1116 = vpop.f32.mrb[0].mxu0
  %v1117 = vadd.f32 %v94, %v1116
  %v1118 = vpop.f32.mrb[0].mxu0
  %1119 = vmatprep.mubr.f32.mxu0 0.0
  %1120 = vmatmul.mubr.f32.gmra.mrb[0].mxu0 %v289
  %v1121 = vpop.f32.mrb[0].mxu0
  %v1122 = vadd.f32 %v94, %v1121
  %v1123 = vpop.f32.mrb[0].mxu0
  %1124 = vdwg.mxu0
  %v1125 = vmax.f32 %v358, 0.0
  %v1126 = vmax.f32 %v364, 0.0
  %v1127 = vmax.f32 %v370, 0.0
  %v1128 = vmax.f32 %v376, 0.0
  %v1129 = vmax.f32 %v382, 0.0
  %v1130 = vmax.f32 %v388, 0.0
  %v1131 = vmax.f32 %v394, 0.0
  %v1132 = vmax.f32 %v400, 0.0
  %v1133 = vmax.f32 %v406, 0.0
  %v1134 = vmax.f32 %v412, 0.0
  %v1135 = vmax.f32 %v418, 0.0
  %v1136 = vmax.f32 %v424, 0.0
  %v1137 = vmax.f32 %v430, 0.0
  %v1138 = vmax.f32 %v436, 0.0
  %v1139 = vmax.f32 %v442, 0.0
  %v1140 = vmax.f32 %v448, 0.0
  %v1141 = vmax.f32 %v454, 0.0
  %v1142 = vmax.f32 %v460, 0.0
  %v1143 = vmax.f32 %v466, 0.0
  %v1144 = vmax.f32 %v472, 0.0
  %v1145 = vmax.f32 %v478, 0.0
  %v1146 = vmax.f32 %v484, 0.0
  %v1147 = vmax.f32 %v490, 0.0
  %v1148 = vmax.f32 %v496, 0.0
  %v1149 = vmax.f32 %v502, 0.0
  %v1150 = vmax.f32 %v508, 0.0
  %v1151 = vmax.f32 %v514, 0.0
  %v1152 = vmax.f32 %v520, 0.0
  %v1153 = vmax.f32 %v526, 0.0
  %v1154 = vmax.f32 %v532, 0.0
  %v1155 = vmax.f32 %v538, 0.0
  %v1156 = vmax.f32 %v544, 0.0
  %v1157 = vmax.f32 %v550, 0.0
  %v1158 = vmax.f32 %v556, 0.0
  %v1159 = vmax.f32 %v562, 0.0
  %v1160 = vmax.f32 %v568, 0.0
  %v1161 = vmax.f32 %v574, 0.0
  %v1162 = vmax.f32 %v580, 0.0
  %v1163 = vmax.f32 %v586, 0.0
  %v1164 = vmax.f32 %v592, 0.0
  %v1165 = vmax.f32 %v598, 0.0
  %v1166 = vmax.f32 %v604, 0.0
  %v1167 = vmax.f32 %v610, 0.0
  %v1168 = vmax.f32 %v616, 0.0
  %v1169 = vmax.f32 %v622, 0.0
  %v1170 = vmax.f32 %v628, 0.0
  %v1171 = vmax.f32 %v634, 0.0
  %v1172 = vmax.f32 %v640, 0.0
  %v1173 = vmax.f32 %v646, 0.0
  %v1174 = vmax.f32 %v652, 0.0
  %v1175 = vmax.f32 %v658, 0.0
  %v1176 = vmax.f32 %v664, 0.0
  %v1177 = vmax.f32 %v670, 0.0
  %v1178 = vmax.f32 %v676, 0.0
  %v1179 = vmax.f32 %v682, 0.0
  %v1180 = vmax.f32 %v688, 0.0
  %v1181 = vmax.f32 %v694, 0.0
  %v1182 = vmax.f32 %v700, 0.0
  %v1183 = vmax.f32 %v706, 0.0
  %v1184 = vmax.f32 %v712, 0.0
  %v1185 = vmax.f32 %v718, 0.0
  %v1186 = vmax.f32 %v724, 0.0
  %v1187 = vmax.f32 %v730, 0.0
  %v1188 = vmax.f32 %v736, 0.0
  %v1189 = vand.u32 2147483647, %v358
  %v1190 = vand.u32 2147483647, %v364
  %v1191 = vand.u32 2147483647, %v370
  %v1192 = vand.u32 2147483647, %v376
  %v1193 = vand.u32 2147483647, %v382
  %v1194 = vand.u32 2147483647, %v388
  %v1195 = vand.u32 2147483647, %v394
  %v1196 = vand.u32 2147483647, %v400
  %v1197 = vand.u32 2147483647, %v406
  %v1198 = vand.u32 2147483647, %v412
  %v1199 = vand.u32 2147483647, %v418
  %v1200 = vand.u32 2147483647, %v424
  %v1201 = vand.u32 2147483647, %v430
  %v1202 = vand.u32 2147483647, %v436
  %v1203 = vand.u32 2147483647, %v442
  %v1204 = vand.u32 2147483647, %v448
  %v1205 = vand.u32 2147483647, %v454
  %v1206 = vand.u32 2147483647, %v460
  %v1207 = vand.u32 2147483647, %v466
  %v1208 = vand.u32 2147483647, %v472
  %v1209 = vand.u32 2147483647, %v478
  %v1210 = vand.u32 2147483647, %v484
  %v1211 = vand.u32 2147483647, %v490
  %v1212 = vand.u32 2147483647, %v496
  %v1213 = vand.u32 2147483647, %v502
  %v1214 = vand.u32 2147483647, %v508
  %v1215 = vand.u32 2147483647, %v514
  %v1216 = vand.u32 2147483647, %v520
  %v1217 = vand.u32 2147483647, %v526
  %v1218 = vand.u32 2147483647, %v532
  %v1219 = vand.u32 2147483647, %v538
  %v1220 = vand.u32 2147483647, %v544
  %v1221 = vand.u32 2147483647, %v550
  %v1222 = vand.u32 2147483647, %v556
  %v1223 = vand.u32 2147483647, %v562
  %v1224 = vand.u32 2147483647, %v568
  %v1225 = vand.u32 2147483647, %v574
  %v1226 = vand.u32 2147483647, %v580
  %v1227 = vand.u32 2147483647, %v586
  %v1228 = vand.u32 2147483647, %v592
  %v1229 = vand.u32 2147483647, %v598
  %v1230 = vand.u32 2147483647, %v604
  %v1231 = vand.u32 2147483647, %v610
  %v1232 = vand.u32 2147483647, %v616
  %v1233 = vand.u32 2147483647, %v622
  %v1234 = vand.u32 2147483647, %v628
  %v1235 = vand.u32 2147483647, %v634
  %v1236 = vand.u32 2147483647, %v640
  %v1237 = vand.u32 2147483647, %v646
  %v1238 = vand.u32 2147483647, %v652
  %v1239 = vand.u32 2147483647, %v658
  %v1240 = vand.u32 2147483647, %v664
  %v1241 = vand.u32 2147483647, %v670
  %v1242 = vand.u32 2147483647, %v676
  %v1243 = vand.u32 2147483647, %v682
  %v1244 = vand.u32 2147483647, %v688
  %v1245 = vand.u32 2147483647, %v694
  %v1246 = vand.u32 2147483647, %v700
  %v1247 = vand.u32 2147483647, %v706
  %v1248 = vand.u32 2147483647, %v712
  %v1249 = vand.u32 2147483647, %v718
  %v1250 = vand.u32 2147483647, %v724
  %v1251 = vand.u32 2147483647, %v730
  %v1252 = vand.u32 2147483647, %v736
  %v1253 = vsub.f32 0.0, %v1189
  %v1254 = vsub.f32 0.0, %v1190
  %v1255 = vsub.f32 0.0, %v1191
  %v1256 = vsub.f32 0.0, %v1192
  %v1257 = vsub.f32 0.0, %v1193
  %v1258 = vsub.f32 0.0, %v1194
  %v1259 = vsub.f32 0.0, %v1195
  %v1260 = vsub.f32 0.0, %v1196
  %v1261 = vsub.f32 0.0, %v1197
  %v1262 = vsub.f32 0.0, %v1198
  %v1263 = vsub.f32 0.0, %v1199
  %v1264 = vsub.f32 0.0, %v1200
  %v1265 = vsub.f32 0.0, %v1201
  %v1266 = vsub.f32 0.0, %v1202
  %v1267 = vsub.f32 0.0, %v1203
  %v1268 = vsub.f32 0.0, %v1204
  %v1269 = vsub.f32 0.0, %v1205
  %v1270 = vsub.f32 0.0, %v1206
  %v1271 = vsub.f32 0.0, %v1207
  %v1272 = vsub.f32 0.0, %v1208
  %v1273 = vsub.f32 0.0, %v1209
  %v1274 = vsub.f32 0.0, %v1210
  %v1275 = vsub.f32 0.0, %v1211
  %v1276 = vsub.f32 0.0, %v1212
  %v1277 = vsub.f32 0.0, %v1213
  %v1278 = vsub.f32 0.0, %v1214
  %v1279 = vsub.f32 0.0, %v1215
  %v1280 = vsub.f32 0.0, %v1216
  %v1281 = vsub.f32 0.0, %v1217
  %v1282 = vsub.f32 0.0, %v1218
  %v1283 = vsub.f32 0.0, %v1219
  %v1284 = vsub.f32 0.0, %v1220
  %v1285 = vsub.f32 0.0, %v1221
  %v1286 = vsub.f32 0.0, %v1222
  %v1287 = vsub.f32 0.0, %v1223
  %v1288 = vsub.f32 0.0, %v1224
  %v1289 = vsub.f32 0.0, %v1225
  %v1290 = vsub.f32 0.0, %v1226
  %v1291 = vsub.f32 0.0, %v1227
  %v1292 = vsub.f32 0.0, %v1228
  %v1293 = vsub.f32 0.0, %v1229
  %v1294 = vsub.f32 0.0, %v1230
  %v1295 = vsub.f32 0.0, %v1231
  %v1296 = vsub.f32 0.0, %v1232
  %v1297 = vsub.f32 0.0, %v1233
  %v1298 = vsub.f32 0.0, %v1234
  %v1299 = vsub.f32 0.0, %v1235
  %v1300 = vsub.f32 0.0, %v1236
  %v1301 = vsub.f32 0.0, %v1237
  %v1302 = vsub.f32 0.0, %v1238
  %v1303 = vsub.f32 0.0, %v1239
  %v1304 = vsub.f32 0.0, %v1240
  %v1305 = vsub.f32 0.0, %v1241
  %v1306 = vsub.f32 0.0, %v1242
  %v1307 = vsub.f32 0.0, %v1243
  %v1308 = vsub.f32 0.0, %v1244
  %v1309 = vsub.f32 0.0, %v1245
  %v1310 = vsub.f32 0.0, %v1246
  %v1311 = vsub.f32 0.0, %v1247
  %v1312 = vsub.f32 0.0, %v1248
  %v1313 = vsub.f32 0.0, %v1249
  %v1314 = vsub.f32 0.0, %v1250
  %v1315 = vsub.f32 0.0, %v1251
  %v1316 = vsub.f32 0.0, %v1252
  %v1317 = vmul.f32 %v1253, 1.442695
  %v1318 = vpow.pop %v1317
  %v1319 = vmul.f32 %v1254, 1.442695
  %v1320 = vpow.pop %v1319
  %v1321 = vmul.f32 %v1255, 1.442695
  %v1322 = vpow.pop %v1321
  %v1323 = vmul.f32 %v1256, 1.442695
  %v1324 = vpow.pop %v1323
  %v1325 = vmul.f32 %v1257, 1.442695
  %v1326 = vpow.pop %v1325
  %v1327 = vmul.f32 %v1258, 1.442695
  %v1328 = vpow.pop %v1327
  %v1329 = vmul.f32 %v1259, 1.442695
  %v1330 = vpow.pop %v1329
  %v1331 = vmul.f32 %v1260, 1.442695
  %v1332 = vpow.pop %v1331
  %v1333 = vmul.f32 %v1261, 1.442695
  %v1334 = vpow.pop %v1333
  %v1335 = vmul.f32 %v1262, 1.442695
  %v1336 = vpow.pop %v1335
  %v1337 = vmul.f32 %v1263, 1.442695
  %v1338 = vpow.pop %v1337
  %v1339 = vmul.f32 %v1264, 1.442695
  %v1340 = vpow.pop %v1339
  %v1341 = vmul.f32 %v1265, 1.442695
  %v1342 = vpow.pop %v1341
  %v1343 = vmul.f32 %v1266, 1.442695
  %v1344 = vpow.pop %v1343
  %v1345 = vmul.f32 %v1267, 1.442695
  %v1346 = vpow.pop %v1345
  %v1347 = vmul.f32 %v1268, 1.442695
  %v1348 = vpow.pop %v1347
  %v1349 = vmul.f32 %v1269, 1.442695
  %v1350 = vpow.pop %v1349
  %v1351 = vmul.f32 %v1270, 1.442695
  %v1352 = vpow.pop %v1351
  %v1353 = vmul.f32 %v1271, 1.442695
  %v1354 = vpow.pop %v1353
  %v1355 = vmul.f32 %v1272, 1.442695
  %v1356 = vpow.pop %v1355
  %v1357 = vmul.f32 %v1273, 1.442695
  %v1358 = vpow.pop %v1357
  %v1359 = vmul.f32 %v1274, 1.442695
  %v1360 = vpow.pop %v1359
  %v1361 = vmul.f32 %v1275, 1.442695
  %v1362 = vpow.pop %v1361
  %v1363 = vmul.f32 %v1276, 1.442695
  %v1364 = vpow.pop %v1363
  %v1365 = vmul.f32 %v1277, 1.442695
  %v1366 = vpow.pop %v1365
  %v1367 = vmul.f32 %v1278, 1.442695
  %v1368 = vpow.pop %v1367
  %v1369 = vmul.f32 %v1279, 1.442695
  %v1370 = vpow.pop %v1369
  %v1371 = vmul.f32 %v1280, 1.442695
  %v1372 = vpow.pop %v1371
  %v1373 = vmul.f32 %v1281, 1.442695
  %v1374 = vpow.pop %v1373
  %v1375 = vmul.f32 %v1282, 1.442695
  %v1376 = vpow.pop %v1375
  %v1377 = vmul.f32 %v1283, 1.442695
  %v1378 = vpow.pop %v1377
  %v1379 = vmul.f32 %v1284, 1.442695
  %v1380 = vpow.pop %v1379
  %v1381 = vmul.f32 %v1285, 1.442695
  %v1382 = vpow.pop %v1381
  %v1383 = vmul.f32 %v1286, 1.442695
  %v1384 = vpow.pop %v1383
  %v1385 = vmul.f32 %v1287, 1.442695
  %v1386 = vpow.pop %v1385
  %v1387 = vmul.f32 %v1288, 1.442695
  %v1388 = vpow.pop %v1387
  %v1389 = vmul.f32 %v1289, 1.442695
  %v1390 = vpow.pop %v1389
  %v1391 = vmul.f32 %v1290, 1.442695
  %v1392 = vpow.pop %v1391
  %v1393 = vmul.f32 %v1291, 1.442695
  %v1394 = vpow.pop %v1393
  %v1395 = vmul.f32 %v1292, 1.442695
  %v1396 = vpow.pop %v1395
  %v1397 = vmul.f32 %v1293, 1.442695
  %v1398 = vpow.pop %v1397
  %v1399 = vmul.f32 %v1294, 1.442695
  %v1400 = vpow.pop %v1399
  %v1401 = vmul.f32 %v1295, 1.442695
  %v1402 = vpow.pop %v1401
  %v1403 = vmul.f32 %v1296, 1.442695
  %v1404 = vpow.pop %v1403
  %v1405 = vmul.f32 %v1297, 1.442695
  %v1406 = vpow.pop %v1405
  %v1407 = vmul.f32 %v1298, 1.442695
  %v1408 = vpow.pop %v1407
  %v1409 = vmul.f32 %v1299, 1.442695
  %v1410 = vpow.pop %v1409
  %v1411 = vmul.f32 %v1300, 1.442695
  %v1412 = vpow.pop %v1411
  %v1413 = vmul.f32 %v1301, 1.442695
  %v1414 = vpow.pop %v1413
  %v1415 = vmul.f32 %v1302, 1.442695
  %v1416 = vpow.pop %v1415
  %v1417 = vmul.f32 %v1303, 1.442695
  %v1418 = vpow.pop %v1417
  %v1419 = vmul.f32 %v1304, 1.442695
  %v1420 = vpow.pop %v1419
  %v1421 = vmul.f32 %v1305, 1.442695
  %v1422 = vpow.pop %v1421
  %v1423 = vmul.f32 %v1306, 1.442695
  %v1424 = vpow.pop %v1423
  %v1425 = vmul.f32 %v1307, 1.442695
  %v1426 = vpow.pop %v1425
  %v1427 = vmul.f32 %v1308, 1.442695
  %v1428 = vpow.pop %v1427
  %v1429 = vmul.f32 %v1309, 1.442695
  %v1430 = vpow.pop %v1429
  %v1431 = vmul.f32 %v1310, 1.442695
  %v1432 = vpow.pop %v1431
  %v1433 = vmul.f32 %v1311, 1.442695
  %v1434 = vpow.pop %v1433
  %v1435 = vmul.f32 %v1312, 1.442695
  %v1436 = vpow.pop %v1435
  %v1437 = vmul.f32 %v1313, 1.442695
  %v1438 = vpow.pop %v1437
  %v1439 = vmul.f32 %v1314, 1.442695
  %v1440 = vpow.pop %v1439
  %v1441 = vmul.f32 %v1315, 1.442695
  %v1442 = vpow.pop %v1441
  %v1443 = vmul.f32 %v1316, 1.442695
  %v1444 = vpow.pop %v1443
  %v1445 = vadd.f32 %v1318, 1.0
  %v1446 = vlog2.pop %v1445
  %v1447 = vmul.f32 %v1446, 0.6931472
  %v1448 = vmul.f32 -0.5, %v1318
  %v1449 = vadd.f32 %v1448, 1.0
  %v1450 = vmul.f32 %v1449, %v1318
  %v1451 = vand.u32 2147483647, %v1318
  %vm1452 = vcmp.lt.f32.partialorder %v1451, 0.0004427343
  %v1453 = vsel %vm1452, %v1450, %v1447
  %v1454 = vadd.f32 %v1320, 1.0
  %v1455 = vlog2.pop %v1454
  %v1456 = vmul.f32 %v1455, 0.6931472
  %v1457 = vmul.f32 -0.5, %v1320
  %v1458 = vadd.f32 %v1457, 1.0
  %v1459 = vmul.f32 %v1458, %v1320
  %v1460 = vand.u32 2147483647, %v1320
  %vm1461 = vcmp.lt.f32.partialorder %v1460, 0.0004427343
  %v1462 = vsel %vm1461, %v1459, %v1456
  %v1463 = vadd.f32 %v1322, 1.0
  %v1464 = vlog2.pop %v1463
  %v1465 = vmul.f32 %v1464, 0.6931472
  %v1466 = vmul.f32 -0.5, %v1322
  %v1467 = vadd.f32 %v1466, 1.0
  %v1468 = vmul.f32 %v1467, %v1322
  %v1469 = vand.u32 2147483647, %v1322
  %vm1470 = vcmp.lt.f32.partialorder %v1469, 0.0004427343
  %v1471 = vsel %vm1470, %v1468, %v1465
  %v1472 = vadd.f32 %v1324, 1.0
  %v1473 = vlog2.pop %v1472
  %v1474 = vmul.f32 %v1473, 0.6931472
  %v1475 = vmul.f32 -0.5, %v1324
  %v1476 = vadd.f32 %v1475, 1.0
  %v1477 = vmul.f32 %v1476, %v1324
  %v1478 = vand.u32 2147483647, %v1324
  %vm1479 = vcmp.lt.f32.partialorder %v1478, 0.0004427343
  %v1480 = vsel %vm1479, %v1477, %v1474
  %v1481 = vadd.f32 %v1326, 1.0
  %v1482 = vlog2.pop %v1481
  %v1483 = vmul.f32 %v1482, 0.6931472
  %v1484 = vmul.f32 -0.5, %v1326
  %v1485 = vadd.f32 %v1484, 1.0
  %v1486 = vmul.f32 %v1485, %v1326
  %v1487 = vand.u32 2147483647, %v1326
  %vm1488 = vcmp.lt.f32.partialorder %v1487, 0.0004427343
  %v1489 = vsel %vm1488, %v1486, %v1483
  %v1490 = vadd.f32 %v1328, 1.0
  %v1491 = vlog2.pop %v1490
  %v1492 = vmul.f32 %v1491, 0.6931472
  %v1493 = vmul.f32 -0.5, %v1328
  %v1494 = vadd.f32 %v1493, 1.0
  %v1495 = vmul.f32 %v1494, %v1328
  %v1496 = vand.u32 2147483647, %v1328
  %vm1497 = vcmp.lt.f32.partialorder %v1496, 0.0004427343
  %v1498 = vsel %vm1497, %v1495, %v1492
  %v1499 = vadd.f32 %v1330, 1.0
  %v1500 = vlog2.pop %v1499
  %v1501 = vmul.f32 %v1500, 0.6931472
  %v1502 = vmul.f32 -0.5, %v1330
  %v1503 = vadd.f32 %v1502, 1.0
  %v1504 = vmul.f32 %v1503, %v1330
  %v1505 = vand.u32 2147483647, %v1330
  %vm1506 = vcmp.lt.f32.partialorder %v1505, 0.0004427343
  %v1507 = vsel %vm1506, %v1504, %v1501
  %v1508 = vadd.f32 %v1332, 1.0
  %v1509 = vlog2.pop %v1508
  %v1510 = vmul.f32 %v1509, 0.6931472
  %v1511 = vmul.f32 -0.5, %v1332
  %v1512 = vadd.f32 %v1511, 1.0
  %v1513 = vmul.f32 %v1512, %v1332
  %v1514 = vand.u32 2147483647, %v1332
  %vm1515 = vcmp.lt.f32.partialorder %v1514, 0.0004427343
  %v1516 = vsel %vm1515, %v1513, %v1510
  %v1517 = vadd.f32 %v1334, 1.0
  %v1518 = vlog2.pop %v1517
  %v1519 = vmul.f32 %v1518, 0.6931472
  %v1520 = vmul.f32 -0.5, %v1334
  %v1521 = vadd.f32 %v1520, 1.0
  %v1522 = vmul.f32 %v1521, %v1334
  %v1523 = vand.u32 2147483647, %v1334
  %vm1524 = vcmp.lt.f32.partialorder %v1523, 0.0004427343
  %v1525 = vsel %vm1524, %v1522, %v1519
  %v1526 = vadd.f32 %v1336, 1.0
  %v1527 = vlog2.pop %v1526
  %v1528 = vmul.f32 %v1527, 0.6931472
  %v1529 = vmul.f32 -0.5, %v1336
  %v1530 = vadd.f32 %v1529, 1.0
  %v1531 = vmul.f32 %v1530, %v1336
  %v1532 = vand.u32 2147483647, %v1336
  %vm1533 = vcmp.lt.f32.partialorder %v1532, 0.0004427343
  %v1534 = vsel %vm1533, %v1531, %v1528
  %v1535 = vadd.f32 %v1338, 1.0
  %v1536 = vlog2.pop %v1535
  %v1537 = vmul.f32 %v1536, 0.6931472
  %v1538 = vmul.f32 -0.5, %v1338
  %v1539 = vadd.f32 %v1538, 1.0
  %v1540 = vmul.f32 %v1539, %v1338
  %v1541 = vand.u32 2147483647, %v1338
  %vm1542 = vcmp.lt.f32.partialorder %v1541, 0.0004427343
  %v1543 = vsel %vm1542, %v1540, %v1537
  %v1544 = vadd.f32 %v1340, 1.0
  %v1545 = vlog2.pop %v1544
  %v1546 = vmul.f32 %v1545, 0.6931472
  %v1547 = vmul.f32 -0.5, %v1340
  %v1548 = vadd.f32 %v1547, 1.0
  %v1549 = vmul.f32 %v1548, %v1340
  %v1550 = vand.u32 2147483647, %v1340
  %vm1551 = vcmp.lt.f32.partialorder %v1550, 0.0004427343
  %v1552 = vsel %vm1551, %v1549, %v1546
  %v1553 = vadd.f32 %v1342, 1.0
  %v1554 = vlog2.pop %v1553
  %v1555 = vmul.f32 %v1554, 0.6931472
  %v1556 = vmul.f32 -0.5, %v1342
  %v1557 = vadd.f32 %v1556, 1.0
  %v1558 = vmul.f32 %v1557, %v1342
  %v1559 = vand.u32 2147483647, %v1342
  %vm1560 = vcmp.lt.f32.partialorder %v1559, 0.0004427343
  %v1561 = vsel %vm1560, %v1558, %v1555
  %v1562 = vadd.f32 %v1344, 1.0
  %v1563 = vlog2.pop %v1562
  %v1564 = vmul.f32 %v1563, 0.6931472
  %v1565 = vmul.f32 -0.5, %v1344
  %v1566 = vadd.f32 %v1565, 1.0
  %v1567 = vmul.f32 %v1566, %v1344
  %v1568 = vand.u32 2147483647, %v1344
  %vm1569 = vcmp.lt.f32.partialorder %v1568, 0.0004427343
  %v1570 = vsel %vm1569, %v1567, %v1564
  %v1571 = vadd.f32 %v1346, 1.0
  %v1572 = vlog2.pop %v1571
  %v1573 = vmul.f32 %v1572, 0.6931472
  %v1574 = vmul.f32 -0.5, %v1346
  %v1575 = vadd.f32 %v1574, 1.0
  %v1576 = vmul.f32 %v1575, %v1346
  %v1577 = vand.u32 2147483647, %v1346
  %vm1578 = vcmp.lt.f32.partialorder %v1577, 0.0004427343
  %v1579 = vsel %vm1578, %v1576, %v1573
  %v1580 = vadd.f32 %v1348, 1.0
  %v1581 = vlog2.pop %v1580
  %v1582 = vmul.f32 %v1581, 0.6931472
  %v1583 = vmul.f32 -0.5, %v1348
  %v1584 = vadd.f32 %v1583, 1.0
  %v1585 = vmul.f32 %v1584, %v1348
  %v1586 = vand.u32 2147483647, %v1348
  %vm1587 = vcmp.lt.f32.partialorder %v1586, 0.0004427343
  %v1588 = vsel %vm1587, %v1585, %v1582
  %v1589 = vadd.f32 %v1350, 1.0
  %v1590 = vlog2.pop %v1589
  %v1591 = vmul.f32 %v1590, 0.6931472
  %v1592 = vmul.f32 -0.5, %v1350
  %v1593 = vadd.f32 %v1592, 1.0
  %v1594 = vmul.f32 %v1593, %v1350
  %v1595 = vand.u32 2147483647, %v1350
  %vm1596 = vcmp.lt.f32.partialorder %v1595, 0.0004427343
  %v1597 = vsel %vm1596, %v1594, %v1591
  %v1598 = vadd.f32 %v1352, 1.0
  %v1599 = vlog2.pop %v1598
  %v1600 = vmul.f32 %v1599, 0.6931472
  %v1601 = vmul.f32 -0.5, %v1352
  %v1602 = vadd.f32 %v1601, 1.0
  %v1603 = vmul.f32 %v1602, %v1352
  %v1604 = vand.u32 2147483647, %v1352
  %vm1605 = vcmp.lt.f32.partialorder %v1604, 0.0004427343
  %v1606 = vsel %vm1605, %v1603, %v1600
  %v1607 = vadd.f32 %v1354, 1.0
  %v1608 = vlog2.pop %v1607
  %v1609 = vmul.f32 %v1608, 0.6931472
  %v1610 = vmul.f32 -0.5, %v1354
  %v1611 = vadd.f32 %v1610, 1.0
  %v1612 = vmul.f32 %v1611, %v1354
  %v1613 = vand.u32 2147483647, %v1354
  %vm1614 = vcmp.lt.f32.partialorder %v1613, 0.0004427343
  %v1615 = vsel %vm1614, %v1612, %v1609
  %v1616 = vadd.f32 %v1356, 1.0
  %v1617 = vlog2.pop %v1616
  %v1618 = vmul.f32 %v1617, 0.6931472
  %v1619 = vmul.f32 -0.5, %v1356
  %v1620 = vadd.f32 %v1619, 1.0
  %v1621 = vmul.f32 %v1620, %v1356
  %v1622 = vand.u32 2147483647, %v1356
  %vm1623 = vcmp.lt.f32.partialorder %v1622, 0.0004427343
  %v1624 = vsel %vm1623, %v1621, %v1618
  %v1625 = vadd.f32 %v1358, 1.0
  %v1626 = vlog2.pop %v1625
  %v1627 = vmul.f32 %v1626, 0.6931472
  %v1628 = vmul.f32 -0.5, %v1358
  %v1629 = vadd.f32 %v1628, 1.0
  %v1630 = vmul.f32 %v1629, %v1358
  %v1631 = vand.u32 2147483647, %v1358
  %vm1632 = vcmp.lt.f32.partialorder %v1631, 0.0004427343
  %v1633 = vsel %vm1632, %v1630, %v1627
  %v1634 = vadd.f32 %v1360, 1.0
  %v1635 = vlog2.pop %v1634
  %v1636 = vmul.f32 %v1635, 0.6931472
  %v1637 = vmul.f32 -0.5, %v1360
  %v1638 = vadd.f32 %v1637, 1.0
  %v1639 = vmul.f32 %v1638, %v1360
  %v1640 = vand.u32 2147483647, %v1360
  %vm1641 = vcmp.lt.f32.partialorder %v1640, 0.0004427343
  %v1642 = vsel %vm1641, %v1639, %v1636
  %v1643 = vadd.f32 %v1362, 1.0
  %v1644 = vlog2.pop %v1643
  %v1645 = vmul.f32 %v1644, 0.6931472
  %v1646 = vmul.f32 -0.5, %v1362
  %v1647 = vadd.f32 %v1646, 1.0
  %v1648 = vmul.f32 %v1647, %v1362
  %v1649 = vand.u32 2147483647, %v1362
  %vm1650 = vcmp.lt.f32.partialorder %v1649, 0.0004427343
  %v1651 = vsel %vm1650, %v1648, %v1645
  %v1652 = vadd.f32 %v1364, 1.0
  %v1653 = vlog2.pop %v1652
  %v1654 = vmul.f32 %v1653, 0.6931472
  %v1655 = vmul.f32 -0.5, %v1364
  %v1656 = vadd.f32 %v1655, 1.0
  %v1657 = vmul.f32 %v1656, %v1364
  %v1658 = vand.u32 2147483647, %v1364
  %vm1659 = vcmp.lt.f32.partialorder %v1658, 0.0004427343
  %v1660 = vsel %vm1659, %v1657, %v1654
  %v1661 = vadd.f32 %v1366, 1.0
  %v1662 = vlog2.pop %v1661
  %v1663 = vmul.f32 %v1662, 0.6931472
  %v1664 = vmul.f32 -0.5, %v1366
  %v1665 = vadd.f32 %v1664, 1.0
  %v1666 = vmul.f32 %v1665, %v1366
  %v1667 = vand.u32 2147483647, %v1366
  %vm1668 = vcmp.lt.f32.partialorder %v1667, 0.0004427343
  %v1669 = vsel %vm1668, %v1666, %v1663
  %v1670 = vadd.f32 %v1368, 1.0
  %v1671 = vlog2.pop %v1670
  %v1672 = vmul.f32 %v1671, 0.6931472
  %v1673 = vmul.f32 -0.5, %v1368
  %v1674 = vadd.f32 %v1673, 1.0
  %v1675 = vmul.f32 %v1674, %v1368
  %v1676 = vand.u32 2147483647, %v1368
  %vm1677 = vcmp.lt.f32.partialorder %v1676, 0.0004427343
  %v1678 = vsel %vm1677, %v1675, %v1672
  %v1679 = vadd.f32 %v1370, 1.0
  %v1680 = vlog2.pop %v1679
  %v1681 = vmul.f32 %v1680, 0.6931472
  %v1682 = vmul.f32 -0.5, %v1370
  %v1683 = vadd.f32 %v1682, 1.0
  %v1684 = vmul.f32 %v1683, %v1370
  %v1685 = vand.u32 2147483647, %v1370
  %vm1686 = vcmp.lt.f32.partialorder %v1685, 0.0004427343
  %v1687 = vsel %vm1686, %v1684, %v1681
  %v1688 = vadd.f32 %v1372, 1.0
  %v1689 = vlog2.pop %v1688
  %v1690 = vmul.f32 %v1689, 0.6931472
  %v1691 = vmul.f32 -0.5, %v1372
  %v1692 = vadd.f32 %v1691, 1.0
  %v1693 = vmul.f32 %v1692, %v1372
  %v1694 = vand.u32 2147483647, %v1372
  %vm1695 = vcmp.lt.f32.partialorder %v1694, 0.0004427343
  %v1696 = vsel %vm1695, %v1693, %v1690
  %v1697 = vadd.f32 %v1374, 1.0
  %v1698 = vlog2.pop %v1697
  %v1699 = vmul.f32 %v1698, 0.6931472
  %v1700 = vmul.f32 -0.5, %v1374
  %v1701 = vadd.f32 %v1700, 1.0
  %v1702 = vmul.f32 %v1701, %v1374
  %v1703 = vand.u32 2147483647, %v1374
  %vm1704 = vcmp.lt.f32.partialorder %v1703, 0.0004427343
  %v1705 = vsel %vm1704, %v1702, %v1699
  %v1706 = vadd.f32 %v1376, 1.0
  %v1707 = vlog2.pop %v1706
  %v1708 = vmul.f32 %v1707, 0.6931472
  %v1709 = vmul.f32 -0.5, %v1376
  %v1710 = vadd.f32 %v1709, 1.0
  %v1711 = vmul.f32 %v1710, %v1376
  %v1712 = vand.u32 2147483647, %v1376
  %vm1713 = vcmp.lt.f32.partialorder %v1712, 0.0004427343
  %v1714 = vsel %vm1713, %v1711, %v1708
  %v1715 = vadd.f32 %v1378, 1.0
  %v1716 = vlog2.pop %v1715
  %v1717 = vmul.f32 %v1716, 0.6931472
  %v1718 = vmul.f32 -0.5, %v1378
  %v1719 = vadd.f32 %v1718, 1.0
  %v1720 = vmul.f32 %v1719, %v1378
  %v1721 = vand.u32 2147483647, %v1378
  %vm1722 = vcmp.lt.f32.partialorder %v1721, 0.0004427343
  %v1723 = vsel %vm1722, %v1720, %v1717
  %v1724 = vadd.f32 %v1380, 1.0
  %v1725 = vlog2.pop %v1724
  %v1726 = vmul.f32 %v1725, 0.6931472
  %v1727 = vmul.f32 -0.5, %v1380
  %v1728 = vadd.f32 %v1727, 1.0
  %v1729 = vmul.f32 %v1728, %v1380
  %v1730 = vand.u32 2147483647, %v1380
  %vm1731 = vcmp.lt.f32.partialorder %v1730, 0.0004427343
  %v1732 = vsel %vm1731, %v1729, %v1726
  %v1733 = vadd.f32 %v1382, 1.0
  %v1734 = vlog2.pop %v1733
  %v1735 = vmul.f32 %v1734, 0.6931472
  %v1736 = vmul.f32 -0.5, %v1382
  %v1737 = vadd.f32 %v1736, 1.0
  %v1738 = vmul.f32 %v1737, %v1382
  %v1739 = vand.u32 2147483647, %v1382
  %vm1740 = vcmp.lt.f32.partialorder %v1739, 0.0004427343
  %v1741 = vsel %vm1740, %v1738, %v1735
  %v1742 = vadd.f32 %v1384, 1.0
  %v1743 = vlog2.pop %v1742
  %v1744 = vmul.f32 %v1743, 0.6931472
  %v1745 = vmul.f32 -0.5, %v1384
  %v1746 = vadd.f32 %v1745, 1.0
  %v1747 = vmul.f32 %v1746, %v1384
  %v1748 = vand.u32 2147483647, %v1384
  %vm1749 = vcmp.lt.f32.partialorder %v1748, 0.0004427343
  %v1750 = vsel %vm1749, %v1747, %v1744
  %v1751 = vadd.f32 %v1386, 1.0
  %v1752 = vlog2.pop %v1751
  %v1753 = vmul.f32 %v1752, 0.6931472
  %v1754 = vmul.f32 -0.5, %v1386
  %v1755 = vadd.f32 %v1754, 1.0
  %v1756 = vmul.f32 %v1755, %v1386
  %v1757 = vand.u32 2147483647, %v1386
  %vm1758 = vcmp.lt.f32.partialorder %v1757, 0.0004427343
  %v1759 = vsel %vm1758, %v1756, %v1753
  %v1760 = vadd.f32 %v1388, 1.0
  %v1761 = vlog2.pop %v1760
  %v1762 = vmul.f32 %v1761, 0.6931472
  %v1763 = vmul.f32 -0.5, %v1388
  %v1764 = vadd.f32 %v1763, 1.0
  %v1765 = vmul.f32 %v1764, %v1388
  %v1766 = vand.u32 2147483647, %v1388
  %vm1767 = vcmp.lt.f32.partialorder %v1766, 0.0004427343
  %v1768 = vsel %vm1767, %v1765, %v1762
  %v1769 = vadd.f32 %v1390, 1.0
  %v1770 = vlog2.pop %v1769
  %v1771 = vmul.f32 %v1770, 0.6931472
  %v1772 = vmul.f32 -0.5, %v1390
  %v1773 = vadd.f32 %v1772, 1.0
  %v1774 = vmul.f32 %v1773, %v1390
  %v1775 = vand.u32 2147483647, %v1390
  %vm1776 = vcmp.lt.f32.partialorder %v1775, 0.0004427343
  %v1777 = vsel %vm1776, %v1774, %v1771
  %v1778 = vadd.f32 %v1392, 1.0
  %v1779 = vlog2.pop %v1778
  %v1780 = vmul.f32 %v1779, 0.6931472
  %v1781 = vmul.f32 -0.5, %v1392
  %v1782 = vadd.f32 %v1781, 1.0
  %v1783 = vmul.f32 %v1782, %v1392
  %v1784 = vand.u32 2147483647, %v1392
  %vm1785 = vcmp.lt.f32.partialorder %v1784, 0.0004427343
  %v1786 = vsel %vm1785, %v1783, %v1780
  %v1787 = vadd.f32 %v1394, 1.0
  %v1788 = vlog2.pop %v1787
  %v1789 = vmul.f32 %v1788, 0.6931472
  %v1790 = vmul.f32 -0.5, %v1394
  %v1791 = vadd.f32 %v1790, 1.0
  %v1792 = vmul.f32 %v1791, %v1394
  %v1793 = vand.u32 2147483647, %v1394
  %vm1794 = vcmp.lt.f32.partialorder %v1793, 0.0004427343
  %v1795 = vsel %vm1794, %v1792, %v1789
  %v1796 = vadd.f32 %v1396, 1.0
  %v1797 = vlog2.pop %v1796
  %v1798 = vmul.f32 %v1797, 0.6931472
  %v1799 = vmul.f32 -0.5, %v1396
  %v1800 = vadd.f32 %v1799, 1.0
  %v1801 = vmul.f32 %v1800, %v1396
  %v1802 = vand.u32 2147483647, %v1396
  %vm1803 = vcmp.lt.f32.partialorder %v1802, 0.0004427343
  %v1804 = vsel %vm1803, %v1801, %v1798
  %v1805 = vadd.f32 %v1398, 1.0
  %v1806 = vlog2.pop %v1805
  %v1807 = vmul.f32 %v1806, 0.6931472
  %v1808 = vmul.f32 -0.5, %v1398
  %v1809 = vadd.f32 %v1808, 1.0
  %v1810 = vmul.f32 %v1809, %v1398
  %v1811 = vand.u32 2147483647, %v1398
  %vm1812 = vcmp.lt.f32.partialorder %v1811, 0.0004427343
  %v1813 = vsel %vm1812, %v1810, %v1807
  %v1814 = vadd.f32 %v1400, 1.0
  %v1815 = vlog2.pop %v1814
  %v1816 = vmul.f32 %v1815, 0.6931472
  %v1817 = vmul.f32 -0.5, %v1400
  %v1818 = vadd.f32 %v1817, 1.0
  %v1819 = vmul.f32 %v1818, %v1400
  %v1820 = vand.u32 2147483647, %v1400
  %vm1821 = vcmp.lt.f32.partialorder %v1820, 0.0004427343
  %v1822 = vsel %vm1821, %v1819, %v1816
  %v1823 = vadd.f32 %v1402, 1.0
  %v1824 = vlog2.pop %v1823
  %v1825 = vmul.f32 %v1824, 0.6931472
  %v1826 = vmul.f32 -0.5, %v1402
  %v1827 = vadd.f32 %v1826, 1.0
  %v1828 = vmul.f32 %v1827, %v1402
  %v1829 = vand.u32 2147483647, %v1402
  %vm1830 = vcmp.lt.f32.partialorder %v1829, 0.0004427343
  %v1831 = vsel %vm1830, %v1828, %v1825
  %v1832 = vadd.f32 %v1404, 1.0
  %v1833 = vlog2.pop %v1832
  %v1834 = vmul.f32 %v1833, 0.6931472
  %v1835 = vmul.f32 -0.5, %v1404
  %v1836 = vadd.f32 %v1835, 1.0
  %v1837 = vmul.f32 %v1836, %v1404
  %v1838 = vand.u32 2147483647, %v1404
  %vm1839 = vcmp.lt.f32.partialorder %v1838, 0.0004427343
  %v1840 = vsel %vm1839, %v1837, %v1834
  %v1841 = vadd.f32 %v1406, 1.0
  %v1842 = vlog2.pop %v1841
  %v1843 = vmul.f32 %v1842, 0.6931472
  %v1844 = vmul.f32 -0.5, %v1406
  %v1845 = vadd.f32 %v1844, 1.0
  %v1846 = vmul.f32 %v1845, %v1406
  %v1847 = vand.u32 2147483647, %v1406
  %vm1848 = vcmp.lt.f32.partialorder %v1847, 0.0004427343
  %v1849 = vsel %vm1848, %v1846, %v1843
  %v1850 = vadd.f32 %v1408, 1.0
  %v1851 = vlog2.pop %v1850
  %v1852 = vmul.f32 %v1851, 0.6931472
  %v1853 = vmul.f32 -0.5, %v1408
  %v1854 = vadd.f32 %v1853, 1.0
  %v1855 = vmul.f32 %v1854, %v1408
  %v1856 = vand.u32 2147483647, %v1408
  %vm1857 = vcmp.lt.f32.partialorder %v1856, 0.0004427343
  %v1858 = vsel %vm1857, %v1855, %v1852
  %v1859 = vadd.f32 %v1410, 1.0
  %v1860 = vlog2.pop %v1859
  %v1861 = vmul.f32 %v1860, 0.6931472
  %v1862 = vmul.f32 -0.5, %v1410
  %v1863 = vadd.f32 %v1862, 1.0
  %v1864 = vmul.f32 %v1863, %v1410
  %v1865 = vand.u32 2147483647, %v1410
  %vm1866 = vcmp.lt.f32.partialorder %v1865, 0.0004427343
  %v1867 = vsel %vm1866, %v1864, %v1861
  %v1868 = vadd.f32 %v1412, 1.0
  %v1869 = vlog2.pop %v1868
  %v1870 = vmul.f32 %v1869, 0.6931472
  %v1871 = vmul.f32 -0.5, %v1412
  %v1872 = vadd.f32 %v1871, 1.0
  %v1873 = vmul.f32 %v1872, %v1412
  %v1874 = vand.u32 2147483647, %v1412
  %vm1875 = vcmp.lt.f32.partialorder %v1874, 0.0004427343
  %v1876 = vsel %vm1875, %v1873, %v1870
  %v1877 = vadd.f32 %v1414, 1.0
  %v1878 = vlog2.pop %v1877
  %v1879 = vmul.f32 %v1878, 0.6931472
  %v1880 = vmul.f32 -0.5, %v1414
  %v1881 = vadd.f32 %v1880, 1.0
  %v1882 = vmul.f32 %v1881, %v1414
  %v1883 = vand.u32 2147483647, %v1414
  %vm1884 = vcmp.lt.f32.partialorder %v1883, 0.0004427343
  %v1885 = vsel %vm1884, %v1882, %v1879
  %v1886 = vadd.f32 %v1416, 1.0
  %v1887 = vlog2.pop %v1886
  %v1888 = vmul.f32 %v1887, 0.6931472
  %v1889 = vmul.f32 -0.5, %v1416
  %v1890 = vadd.f32 %v1889, 1.0
  %v1891 = vmul.f32 %v1890, %v1416
  %v1892 = vand.u32 2147483647, %v1416
  %vm1893 = vcmp.lt.f32.partialorder %v1892, 0.0004427343
  %v1894 = vsel %vm1893, %v1891, %v1888
  %v1895 = vadd.f32 %v1418, 1.0
  %v1896 = vlog2.pop %v1895
  %v1897 = vmul.f32 %v1896, 0.6931472
  %v1898 = vmul.f32 -0.5, %v1418
  %v1899 = vadd.f32 %v1898, 1.0
  %v1900 = vmul.f32 %v1899, %v1418
  %v1901 = vand.u32 2147483647, %v1418
  %vm1902 = vcmp.lt.f32.partialorder %v1901, 0.0004427343
  %v1903 = vsel %vm1902, %v1900, %v1897
  %v1904 = vadd.f32 %v1420, 1.0
  %v1905 = vlog2.pop %v1904
  %v1906 = vmul.f32 %v1905, 0.6931472
  %v1907 = vmul.f32 -0.5, %v1420
  %v1908 = vadd.f32 %v1907, 1.0
  %v1909 = vmul.f32 %v1908, %v1420
  %v1910 = vand.u32 2147483647, %v1420
  %vm1911 = vcmp.lt.f32.partialorder %v1910, 0.0004427343
  %v1912 = vsel %vm1911, %v1909, %v1906
  %v1913 = vadd.f32 %v1422, 1.0
  %v1914 = vlog2.pop %v1913
  %v1915 = vmul.f32 %v1914, 0.6931472
  %v1916 = vmul.f32 -0.5, %v1422
  %v1917 = vadd.f32 %v1916, 1.0
  %v1918 = vmul.f32 %v1917, %v1422
  %v1919 = vand.u32 2147483647, %v1422
  %vm1920 = vcmp.lt.f32.partialorder %v1919, 0.0004427343
  %v1921 = vsel %vm1920, %v1918, %v1915
  %v1922 = vadd.f32 %v1424, 1.0
  %v1923 = vlog2.pop %v1922
  %v1924 = vmul.f32 %v1923, 0.6931472
  %v1925 = vmul.f32 -0.5, %v1424
  %v1926 = vadd.f32 %v1925, 1.0
  %v1927 = vmul.f32 %v1926, %v1424
  %v1928 = vand.u32 2147483647, %v1424
  %vm1929 = vcmp.lt.f32.partialorder %v1928, 0.0004427343
  %v1930 = vsel %vm1929, %v1927, %v1924
  %v1931 = vadd.f32 %v1426, 1.0
  %v1932 = vlog2.pop %v1931
  %v1933 = vmul.f32 %v1932, 0.6931472
  %v1934 = vmul.f32 -0.5, %v1426
  %v1935 = vadd.f32 %v1934, 1.0
  %v1936 = vmul.f32 %v1935, %v1426
  %v1937 = vand.u32 2147483647, %v1426
  %vm1938 = vcmp.lt.f32.partialorder %v1937, 0.0004427343
  %v1939 = vsel %vm1938, %v1936, %v1933
  %v1940 = vadd.f32 %v1428, 1.0
  %v1941 = vlog2.pop %v1940
  %v1942 = vmul.f32 %v1941, 0.6931472
  %v1943 = vmul.f32 -0.5, %v1428
  %v1944 = vadd.f32 %v1943, 1.0
  %v1945 = vmul.f32 %v1944, %v1428
  %v1946 = vand.u32 2147483647, %v1428
  %vm1947 = vcmp.lt.f32.partialorder %v1946, 0.0004427343
  %v1948 = vsel %vm1947, %v1945, %v1942
  %v1949 = vadd.f32 %v1430, 1.0
  %v1950 = vlog2.pop %v1949
  %v1951 = vmul.f32 %v1950, 0.6931472
  %v1952 = vmul.f32 -0.5, %v1430
  %v1953 = vadd.f32 %v1952, 1.0
  %v1954 = vmul.f32 %v1953, %v1430
  %v1955 = vand.u32 2147483647, %v1430
  %vm1956 = vcmp.lt.f32.partialorder %v1955, 0.0004427343
  %v1957 = vsel %vm1956, %v1954, %v1951
  %v1958 = vadd.f32 %v1432, 1.0
  %v1959 = vlog2.pop %v1958
  %v1960 = vmul.f32 %v1959, 0.6931472
  %v1961 = vmul.f32 -0.5, %v1432
  %v1962 = vadd.f32 %v1961, 1.0
  %v1963 = vmul.f32 %v1962, %v1432
  %v1964 = vand.u32 2147483647, %v1432
  %vm1965 = vcmp.lt.f32.partialorder %v1964, 0.0004427343
  %v1966 = vsel %vm1965, %v1963, %v1960
  %v1967 = vadd.f32 %v1434, 1.0
  %v1968 = vlog2.pop %v1967
  %v1969 = vmul.f32 %v1968, 0.6931472
  %v1970 = vmul.f32 -0.5, %v1434
  %v1971 = vadd.f32 %v1970, 1.0
  %v1972 = vmul.f32 %v1971, %v1434
  %v1973 = vand.u32 2147483647, %v1434
  %vm1974 = vcmp.lt.f32.partialorder %v1973, 0.0004427343
  %v1975 = vsel %vm1974, %v1972, %v1969
  %v1976 = vadd.f32 %v1436, 1.0
  %v1977 = vlog2.pop %v1976
  %v1978 = vmul.f32 %v1977, 0.6931472
  %v1979 = vmul.f32 -0.5, %v1436
  %v1980 = vadd.f32 %v1979, 1.0
  %v1981 = vmul.f32 %v1980, %v1436
  %v1982 = vand.u32 2147483647, %v1436
  %vm1983 = vcmp.lt.f32.partialorder %v1982, 0.0004427343
  %v1984 = vsel %vm1983, %v1981, %v1978
  %v1985 = vadd.f32 %v1438, 1.0
  %v1986 = vlog2.pop %v1985
  %v1987 = vmul.f32 %v1986, 0.6931472
  %v1988 = vmul.f32 -0.5, %v1438
  %v1989 = vadd.f32 %v1988, 1.0
  %v1990 = vmul.f32 %v1989, %v1438
  %v1991 = vand.u32 2147483647, %v1438
  %vm1992 = vcmp.lt.f32.partialorder %v1991, 0.0004427343
  %v1993 = vsel %vm1992, %v1990, %v1987
  %v1994 = vadd.f32 %v1440, 1.0
  %v1995 = vlog2.pop %v1994
  %v1996 = vmul.f32 %v1995, 0.6931472
  %v1997 = vmul.f32 -0.5, %v1440
  %v1998 = vadd.f32 %v1997, 1.0
  %v1999 = vmul.f32 %v1998, %v1440
  %v2000 = vand.u32 2147483647, %v1440
  %vm2001 = vcmp.lt.f32.partialorder %v2000, 0.0004427343
  %v2002 = vsel %vm2001, %v1999, %v1996
  %v2003 = vadd.f32 %v1442, 1.0
  %v2004 = vlog2.pop %v2003
  %v2005 = vmul.f32 %v2004, 0.6931472
  %v2006 = vmul.f32 -0.5, %v1442
  %v2007 = vadd.f32 %v2006, 1.0
  %v2008 = vmul.f32 %v2007, %v1442
  %v2009 = vand.u32 2147483647, %v1442
  %vm2010 = vcmp.lt.f32.partialorder %v2009, 0.0004427343
  %v2011 = vsel %vm2010, %v2008, %v2005
  %v2012 = vadd.f32 %v1444, 1.0
  %v2013 = vlog2.pop %v2012
  %v2014 = vmul.f32 %v2013, 0.6931472
  %v2015 = vmul.f32 -0.5, %v1444
  %v2016 = vadd.f32 %v2015, 1.0
  %v2017 = vmul.f32 %v2016, %v1444
  %v2018 = vand.u32 2147483647, %v1444
  %vm2019 = vcmp.lt.f32.partialorder %v2018, 0.0004427343
  %v2020 = vsel %vm2019, %v2017, %v2014
  %v2021 = vadd.f32 %v1125, %v1453
  %v2022 = vadd.f32 %v1126, %v1462
  %v2023 = vadd.f32 %v1127, %v1471
  %v2024 = vadd.f32 %v1128, %v1480
  %v2025 = vadd.f32 %v1129, %v1489
  %v2026 = vadd.f32 %v1130, %v1498
  %v2027 = vadd.f32 %v1131, %v1507
  %v2028 = vadd.f32 %v1132, %v1516
  %v2029 = vadd.f32 %v1133, %v1525
  %v2030 = vadd.f32 %v1134, %v1534
  %v2031 = vadd.f32 %v1135, %v1543
  %v2032 = vadd.f32 %v1136, %v1552
  %v2033 = vadd.f32 %v1137, %v1561
  %v2034 = vadd.f32 %v1138, %v1570
  %v2035 = vadd.f32 %v1139, %v1579
  %v2036 = vadd.f32 %v1140, %v1588
  %v2037 = vadd.f32 %v1141, %v1597
  %v2038 = vadd.f32 %v1142, %v1606
  %v2039 = vadd.f32 %v1143, %v1615
  %v2040 = vadd.f32 %v1144, %v1624
  %v2041 = vadd.f32 %v1145, %v1633
  %v2042 = vadd.f32 %v1146, %v1642
  %v2043 = vadd.f32 %v1147, %v1651
  %v2044 = vadd.f32 %v1148, %v1660
  %v2045 = vadd.f32 %v1149, %v1669
  %v2046 = vadd.f32 %v1150, %v1678
  %v2047 = vadd.f32 %v1151, %v1687
  %v2048 = vadd.f32 %v1152, %v1696
  %v2049 = vadd.f32 %v1153, %v1705
  %v2050 = vadd.f32 %v1154, %v1714
  %v2051 = vadd.f32 %v1155, %v1723
  %v2052 = vadd.f32 %v1156, %v1732
  %v2053 = vadd.f32 %v1157, %v1741
  %v2054 = vadd.f32 %v1158, %v1750
  %v2055 = vadd.f32 %v1159, %v1759
  %v2056 = vadd.f32 %v1160, %v1768
  %v2057 = vadd.f32 %v1161, %v1777
  %v2058 = vadd.f32 %v1162, %v1786
  %v2059 = vadd.f32 %v1163, %v1795
  %v2060 = vadd.f32 %v1164, %v1804
  %v2061 = vadd.f32 %v1165, %v1813
  %v2062 = vadd.f32 %v1166, %v1822
  %v2063 = vadd.f32 %v1167, %v1831
  %v2064 = vadd.f32 %v1168, %v1840
  %v2065 = vadd.f32 %v1169, %v1849
  %v2066 = vadd.f32 %v1170, %v1858
  %v2067 = vadd.f32 %v1171, %v1867
  %v2068 = vadd.f32 %v1172, %v1876
  %v2069 = vadd.f32 %v1173, %v1885
  %v2070 = vadd.f32 %v1174, %v1894
  %v2071 = vadd.f32 %v1175, %v1903
  %v2072 = vadd.f32 %v1176, %v1912
  %v2073 = vadd.f32 %v1177, %v1921
  %v2074 = vadd.f32 %v1178, %v1930
  %v2075 = vadd.f32 %v1179, %v1939
  %v2076 = vadd.f32 %v1180, %v1948
  %v2077 = vadd.f32 %v1181, %v1957
  %v2078 = vadd.f32 %v1182, %v1966
  %v2079 = vadd.f32 %v1183, %v1975
  %v2080 = vadd.f32 %v1184, %v1984
  %v2081 = vadd.f32 %v1185, %v1993
  %v2082 = vadd.f32 %v1186, %v2002
  %v2083 = vadd.f32 %v1187, %v2011
  %v2084 = vadd.f32 %v1188, %v2020
  %v2085 = vmul.f32 %v360, %v807
  %v2086 = vmul.f32 %v366, %v812
  %v2087 = vmul.f32 %v372, %v817
  %v2088 = vmul.f32 %v378, %v822
  %v2089 = vmul.f32 %v384, %v827
  %v2090 = vmul.f32 %v390, %v832
  %v2091 = vmul.f32 %v396, %v837
  %v2092 = vmul.f32 %v402, %v842
  %v2093 = vmul.f32 %v408, %v847
  %v2094 = vmul.f32 %v414, %v852
  %v2095 = vmul.f32 %v420, %v857
  %v2096 = vmul.f32 %v426, %v862
  %v2097 = vmul.f32 %v432, %v867
  %v2098 = vmul.f32 %v438, %v872
  %v2099 = vmul.f32 %v444, %v877
  %v2100 = vmul.f32 %v450, %v882
  %v2101 = vmul.f32 %v456, %v887
  %v2102 = vmul.f32 %v462, %v892
  %v2103 = vmul.f32 %v468, %v897
  %v2104 = vmul.f32 %v474, %v902
  %v2105 = vmul.f32 %v480, %v907
  %v2106 = vmul.f32 %v486, %v912
  %v2107 = vmul.f32 %v492, %v917
  %v2108 = vmul.f32 %v498, %v922
  %v2109 = vmul.f32 %v504, %v927
  %v2110 = vmul.f32 %v510, %v932
  %v2111 = vmul.f32 %v516, %v937
  %v2112 = vmul.f32 %v522, %v942
  %v2113 = vmul.f32 %v528, %v947
  %v2114 = vmul.f32 %v534, %v952
  %v2115 = vmul.f32 %v540, %v957
  %v2116 = vmul.f32 %v546, %v962
  %v2117 = vmul.f32 %v552, %v967
  %v2118 = vmul.f32 %v558, %v972
  %v2119 = vmul.f32 %v564, %v977
  %v2120 = vmul.f32 %v570, %v982
  %v2121 = vmul.f32 %v576, %v987
  %v2122 = vmul.f32 %v582, %v992
  %v2123 = vmul.f32 %v588, %v997
  %v2124 = vmul.f32 %v594, %v1002
  %v2125 = vmul.f32 %v600, %v1007
  %v2126 = vmul.f32 %v606, %v1012
  %v2127 = vmul.f32 %v612, %v1017
  %v2128 = vmul.f32 %v618, %v1022
  %v2129 = vmul.f32 %v624, %v1027
  %v2130 = vmul.f32 %v630, %v1032
  %v2131 = vmul.f32 %v636, %v1037
  %v2132 = vmul.f32 %v642, %v1042
  %v2133 = vmul.f32 %v648, %v1047
  %v2134 = vmul.f32 %v654, %v1052
  %v2135 = vmul.f32 %v660, %v1057
  %v2136 = vmul.f32 %v666, %v1062
  %v2137 = vmul.f32 %v672, %v1067
  %v2138 = vmul.f32 %v678, %v1072
  %v2139 = vmul.f32 %v684, %v1077
  %v2140 = vmul.f32 %v690, %v1082
  %v2141 = vmul.f32 %v696, %v1087
  %v2142 = vmul.f32 %v702, %v1092
  %v2143 = vmul.f32 %v708, %v1097
  %v2144 = vmul.f32 %v714, %v1102
  %v2145 = vmul.f32 %v720, %v1107
  %v2146 = vmul.f32 %v726, %v1112
  %v2147 = vmul.f32 %v732, %v1117
  %v2148 = vmul.f32 %v738, %v1122
  %2149 = vadd.xlane.f32.xlu0 %v2085
  %v2150 = vpop.xlane.xlu0 %2149
  %2151 = vadd.xlane.f32.xlu0 %v2086
  %v2152 = vpop.xlane.xlu0 %2151
  %2153 = vadd.xlane.f32.xlu0 %v2087
  %v2154 = vpop.xlane.xlu0 %2153
  %2155 = vadd.xlane.f32.xlu0 %v2088
  %v2156 = vpop.xlane.xlu0 %2155
  %2157 = vadd.xlane.f32.xlu0 %v2089
  %v2158 = vpop.xlane.xlu0 %2157
  %2159 = vadd.xlane.f32.xlu0 %v2090
  %v2160 = vpop.xlane.xlu0 %2159
  %2161 = vadd.xlane.f32.xlu0 %v2091
  %v2162 = vpop.xlane.xlu0 %2161
  %2163 = vadd.xlane.f32.xlu0 %v2092
  %v2164 = vpop.xlane.xlu0 %2163
  %2165 = vadd.xlane.f32.xlu0 %v2093
  %v2166 = vpop.xlane.xlu0 %2165
  %2167 = vadd.xlane.f32.xlu0 %v2094
  %v2168 = vpop.xlane.xlu0 %2167
  %2169 = vadd.xlane.f32.xlu0 %v2095
  %v2170 = vpop.xlane.xlu0 %2169
  %2171 = vadd.xlane.f32.xlu0 %v2096
  %v2172 = vpop.xlane.xlu0 %2171
  %2173 = vadd.xlane.f32.xlu0 %v2097
  %v2174 = vpop.xlane.xlu0 %2173
  %2175 = vadd.xlane.f32.xlu0 %v2098
  %v2176 = vpop.xlane.xlu0 %2175
  %2177 = vadd.xlane.f32.xlu0 %v2099
  %v2178 = vpop.xlane.xlu0 %2177
  %2179 = vadd.xlane.f32.xlu0 %v2100
  %v2180 = vpop.xlane.xlu0 %2179
  %2181 = vadd.xlane.f32.xlu0 %v2101
  %v2182 = vpop.xlane.xlu0 %2181
  %2183 = vadd.xlane.f32.xlu0 %v2102
  %v2184 = vpop.xlane.xlu0 %2183
  %2185 = vadd.xlane.f32.xlu0 %v2103
  %v2186 = vpop.xlane.xlu0 %2185
  %2187 = vadd.xlane.f32.xlu0 %v2104
  %v2188 = vpop.xlane.xlu0 %2187
  %2189 = vadd.xlane.f32.xlu0 %v2105
  %v2190 = vpop.xlane.xlu0 %2189
  %2191 = vadd.xlane.f32.xlu0 %v2106
  %v2192 = vpop.xlane.xlu0 %2191
  %2193 = vadd.xlane.f32.xlu0 %v2107
  %v2194 = vpop.xlane.xlu0 %2193
  %2195 = vadd.xlane.f32.xlu0 %v2108
  %v2196 = vpop.xlane.xlu0 %2195
  %2197 = vadd.xlane.f32.xlu0 %v2109
  %v2198 = vpop.xlane.xlu0 %2197
  %2199 = vadd.xlane.f32.xlu0 %v2110
  %v2200 = vpop.xlane.xlu0 %2199
  %2201 = vadd.xlane.f32.xlu0 %v2111
  %v2202 = vpop.xlane.xlu0 %2201
  %2203 = vadd.xlane.f32.xlu0 %v2112
  %v2204 = vpop.xlane.xlu0 %2203
  %2205 = vadd.xlane.f32.xlu0 %v2113
  %v2206 = vpop.xlane.xlu0 %2205
  %2207 = vadd.xlane.f32.xlu0 %v2114
  %v2208 = vpop.xlane.xlu0 %2207
  %2209 = vadd.xlane.f32.xlu0 %v2115
  %v2210 = vpop.xlane.xlu0 %2209
  %2211 = vadd.xlane.f32.xlu0 %v2116
  %v2212 = vpop.xlane.xlu0 %2211
  %2213 = vadd.xlane.f32.xlu0 %v2117
  %v2214 = vpop.xlane.xlu0 %2213
  %2215 = vadd.xlane.f32.xlu0 %v2118
  %v2216 = vpop.xlane.xlu0 %2215
  %2217 = vadd.xlane.f32.xlu0 %v2119
  %v2218 = vpop.xlane.xlu0 %2217
  %2219 = vadd.xlane.f32.xlu0 %v2120
  %v2220 = vpop.xlane.xlu0 %2219
  %2221 = vadd.xlane.f32.xlu0 %v2121
  %v2222 = vpop.xlane.xlu0 %2221
  %2223 = vadd.xlane.f32.xlu0 %v2122
  %v2224 = vpop.xlane.xlu0 %2223
  %2225 = vadd.xlane.f32.xlu0 %v2123
  %v2226 = vpop.xlane.xlu0 %2225
  %2227 = vadd.xlane.f32.xlu0 %v2124
  %v2228 = vpop.xlane.xlu0 %2227
  %2229 = vadd.xlane.f32.xlu0 %v2125
  %v2230 = vpop.xlane.xlu0 %2229
  %2231 = vadd.xlane.f32.xlu0 %v2126
  %v2232 = vpop.xlane.xlu0 %2231
  %2233 = vadd.xlane.f32.xlu0 %v2127
  %v2234 = vpop.xlane.xlu0 %2233
  %2235 = vadd.xlane.f32.xlu0 %v2128
  %v2236 = vpop.xlane.xlu0 %2235
  %2237 = vadd.xlane.f32.xlu0 %v2129
  %v2238 = vpop.xlane.xlu0 %2237
  %2239 = vadd.xlane.f32.xlu0 %v2130
  %v2240 = vpop.xlane.xlu0 %2239
  %2241 = vadd.xlane.f32.xlu0 %v2131
  %v2242 = vpop.xlane.xlu0 %2241
  %2243 = vadd.xlane.f32.xlu0 %v2132
  %v2244 = vpop.xlane.xlu0 %2243
  %2245 = vadd.xlane.f32.xlu0 %v2133
  %v2246 = vpop.xlane.xlu0 %2245
  %2247 = vadd.xlane.f32.xlu0 %v2134
  %v2248 = vpop.xlane.xlu0 %2247
  %2249 = vadd.xlane.f32.xlu0 %v2135
  %v2250 = vpop.xlane.xlu0 %2249
  %2251 = vadd.xlane.f32.xlu0 %v2136
  %v2252 = vpop.xlane.xlu0 %2251
  %2253 = vadd.xlane.f32.xlu0 %v2137
  %v2254 = vpop.xlane.xlu0 %2253
  %2255 = vadd.xlane.f32.xlu0 %v2138
  %v2256 = vpop.xlane.xlu0 %2255
  %2257 = vadd.xlane.f32.xlu0 %v2139
  %v2258 = vpop.xlane.xlu0 %2257
  %2259 = vadd.xlane.f32.xlu0 %v2140
  %v2260 = vpop.xlane.xlu0 %2259
  %2261 = vadd.xlane.f32.xlu0 %v2141
  %v2262 = vpop.xlane.xlu0 %2261
  %2263 = vadd.xlane.f32.xlu0 %v2142
  %v2264 = vpop.xlane.xlu0 %2263
  %2265 = vadd.xlane.f32.xlu0 %v2143
  %v2266 = vpop.xlane.xlu0 %2265
  %2267 = vadd.xlane.f32.xlu0 %v2144
  %v2268 = vpop.xlane.xlu0 %2267
  %2269 = vadd.xlane.f32.xlu0 %v2145
  %v2270 = vpop.xlane.xlu0 %2269
  %2271 = vadd.xlane.f32.xlu0 %v2146
  %v2272 = vpop.xlane.xlu0 %2271
  %2273 = vadd.xlane.f32.xlu0 %v2147
  %v2274 = vpop.xlane.xlu0 %2273
  %2275 = vadd.xlane.f32.xlu0 %v2148
  %v2276 = vpop.xlane.xlu0 %2275
  %v2277 = vmul.f32 %v14, %v2021
  %v2278 = vmul.f32 %v15, %v2022
  %v2279 = vmul.f32 %v16, %v2023
  %v2280 = vmul.f32 %v17, %v2024
  %v2281 = vmul.f32 %v18, %v2025
  %v2282 = vmul.f32 %v19, %v2026
  %v2283 = vmul.f32 %v20, %v2027
  %v2284 = vmul.f32 %v21, %v2028
  %v2285 = vmul.f32 %v22, %v2029
  %v2286 = vmul.f32 %v23, %v2030
  %v2287 = vmul.f32 %v24, %v2031
  %v2288 = vmul.f32 %v25, %v2032
  %v2289 = vmul.f32 %v26, %v2033
  %v2290 = vmul.f32 %v27, %v2034
  %v2291 = vmul.f32 %v28, %v2035
  %v2292 = vmul.f32 %v29, %v2036
  %v2293 = vmul.f32 %v30, %v2037
  %v2294 = vmul.f32 %v31, %v2038
  %v2295 = vmul.f32 %v32, %v2039
  %v2296 = vmul.f32 %v33, %v2040
  %v2297 = vmul.f32 %v34, %v2041
  %v2298 = vmul.f32 %v35, %v2042
  %v2299 = vmul.f32 %v36, %v2043
  %v2300 = vmul.f32 %v37, %v2044
  %v2301 = vmul.f32 %v38, %v2045
  %v2302 = vmul.f32 %v39, %v2046
  %v2303 = vmul.f32 %v40, %v2047
  %v2304 = vmul.f32 %v41, %v2048
  %v2305 = vmul.f32 %v42, %v2049
  %v2306 = vmul.f32 %v43, %v2050
  %v2307 = vmul.f32 %v44, %v2051
  %v2308 = vmul.f32 %v45, %v2052
  %v2309 = vmul.f32 %v46, %v2053
  %v2310 = vmul.f32 %v47, %v2054
  %v2311 = vmul.f32 %v48, %v2055
  %v2312 = vmul.f32 %v49, %v2056
  %v2313 = vmul.f32 %v50, %v2057
  %v2314 = vmul.f32 %v51, %v2058
  %v2315 = vmul.f32 %v52, %v2059
  %v2316 = vmul.f32 %v53, %v2060
  %v2317 = vmul.f32 %v54, %v2061
  %v2318 = vmul.f32 %v55, %v2062
  %v2319 = vmul.f32 %v56, %v2063
  %v2320 = vmul.f32 %v57, %v2064
  %v2321 = vmul.f32 %v58, %v2065
  %v2322 = vmul.f32 %v59, %v2066
  %v2323 = vmul.f32 %v60, %v2067
  %v2324 = vmul.f32 %v61, %v2068
  %v2325 = vmul.f32 %v62, %v2069
  %v2326 = vmul.f32 %v63, %v2070
  %v2327 = vmul.f32 %v64, %v2071
  %v2328 = vmul.f32 %v65, %v2072
  %v2329 = vmul.f32 %v66, %v2073
  %v2330 = vmul.f32 %v67, %v2074
  %v2331 = vmul.f32 %v68, %v2075
  %v2332 = vmul.f32 %v69, %v2076
  %v2333 = vmul.f32 %v70, %v2077
  %v2334 = vmul.f32 %v71, %v2078
  %v2335 = vmul.f32 %v72, %v2079
  %v2336 = vmul.f32 %v73, %v2080
  %v2337 = vmul.f32 %v74, %v2081
  %v2338 = vmul.f32 %v75, %v2082
  %v2339 = vmul.f32 %v76, %v2083
  %v2340 = vmul.f32 %v77, %v2084
  %v2341 = vmul.f32 %v2277, %v2150
  %v2342 = vmul.f32 %v2278, %v2152
  %v2343 = vmul.f32 %v2279, %v2154
  %v2344 = vmul.f32 %v2280, %v2156
  %v2345 = vmul.f32 %v2281, %v2158
  %v2346 = vmul.f32 %v2282, %v2160
  %v2347 = vmul.f32 %v2283, %v2162
  %v2348 = vmul.f32 %v2284, %v2164
  %v2349 = vmul.f32 %v2285, %v2166
  %v2350 = vmul.f32 %v2286, %v2168
  %v2351 = vmul.f32 %v2287, %v2170
  %v2352 = vmul.f32 %v2288, %v2172
  %v2353 = vmul.f32 %v2289, %v2174
  %v2354 = vmul.f32 %v2290, %v2176
  %v2355 = vmul.f32 %v2291, %v2178
  %v2356 = vmul.f32 %v2292, %v2180
  %v2357 = vmul.f32 %v2293, %v2182
  %v2358 = vmul.f32 %v2294, %v2184
  %v2359 = vmul.f32 %v2295, %v2186
  %v2360 = vmul.f32 %v2296, %v2188
  %v2361 = vmul.f32 %v2297, %v2190
  %v2362 = vmul.f32 %v2298, %v2192
  %v2363 = vmul.f32 %v2299, %v2194
  %v2364 = vmul.f32 %v2300, %v2196
  %v2365 = vmul.f32 %v2301, %v2198
  %v2366 = vmul.f32 %v2302, %v2200
  %v2367 = vmul.f32 %v2303, %v2202
  %v2368 = vmul.f32 %v2304, %v2204
  %v2369 = vmul.f32 %v2305, %v2206
  %v2370 = vmul.f32 %v2306, %v2208
  %v2371 = vmul.f32 %v2307, %v2210
  %v2372 = vmul.f32 %v2308, %v2212
  %v2373 = vmul.f32 %v2309, %v2214
  %v2374 = vmul.f32 %v2310, %v2216
  %v2375 = vmul.f32 %v2311, %v2218
  %v2376 = vmul.f32 %v2312, %v2220
  %v2377 = vmul.f32 %v2313, %v2222
  %v2378 = vmul.f32 %v2314, %v2224
  %v2379 = vmul.f32 %v2315, %v2226
  %v2380 = vmul.f32 %v2316, %v2228
  %v2381 = vmul.f32 %v2317, %v2230
  %v2382 = vmul.f32 %v2318, %v2232
  %v2383 = vmul.f32 %v2319, %v2234
  %v2384 = vmul.f32 %v2320, %v2236
  %v2385 = vmul.f32 %v2321, %v2238
  %v2386 = vmul.f32 %v2322, %v2240
  %v2387 = vmul.f32 %v2323, %v2242
  %v2388 = vmul.f32 %v2324, %v2244
  %v2389 = vmul.f32 %v2325, %v2246
  %v2390 = vmul.f32 %v2326, %v2248
  %v2391 = vmul.f32 %v2327, %v2250
  %v2392 = vmul.f32 %v2328, %v2252
  %v2393 = vmul.f32 %v2329, %v2254
  %v2394 = vmul.f32 %v2330, %v2256
  %v2395 = vmul.f32 %v2331, %v2258
  %v2396 = vmul.f32 %v2332, %v2260
  %v2397 = vmul.f32 %v2333, %v2262
  %v2398 = vmul.f32 %v2334, %v2264
  %v2399 = vmul.f32 %v2335, %v2266
  %v2400 = vmul.f32 %v2336, %v2268
  %v2401 = vmul.f32 %v2337, %v2270
  %v2402 = vmul.f32 %v2338, %v2272
  %v2403 = vmul.f32 %v2339, %v2274
  %v2404 = vmul.f32 %v2340, %v2276
  %2405 = vst.msk [vmem:[%s3] sm:$0xff] %vm98, %v2341
  %2406 = vst.msk [vmem:[%s3 + $0x8] sm:$0xff] %vm98, %v2342
  %2407 = vst.msk [vmem:[%s3 + $0x10] sm:$0xff] %vm98, %v2343
  %2408 = vst.msk [vmem:[%s3 + $0x18] sm:$0xff] %vm98, %v2344
  %2409 = vst.msk [vmem:[%s3 + $0x20] sm:$0xff] %vm98, %v2345
  %2410 = vst.msk [vmem:[%s3 + $0x28] sm:$0xff] %vm98, %v2346
  %2411 = vst.msk [vmem:[%s3 + $0x30] sm:$0xff] %vm98, %v2347
  %2412 = vst.msk [vmem:[%s3 + $0x38] sm:$0xff] %vm98, %v2348
  %2413 = vst.msk [vmem:[%s3 + $0x40] sm:$0xff] %vm98, %v2349
  %2414 = vst.msk [vmem:[%s3 + $0x48] sm:$0xff] %vm98, %v2350
  %2415 = vst.msk [vmem:[%s3 + $0x50] sm:$0xff] %vm98, %v2351
  %2416 = vst.msk [vmem:[%s3 + $0x58] sm:$0xff] %vm98, %v2352
  %2417 = vst.msk [vmem:[%s3 + $0x60] sm:$0xff] %vm98, %v2353
  %2418 = vst.msk [vmem:[%s3 + $0x68] sm:$0xff] %vm98, %v2354
  %2419 = vst.msk [vmem:[%s3 + $0x70] sm:$0xff] %vm98, %v2355
  %2420 = vst.msk [vmem:[%s3 + $0x78] sm:$0xff] %vm98, %v2356
  %2421 = vst.msk [vmem:[%s3 + $0x80] sm:$0xff] %vm98, %v2357
  %2422 = vst.msk [vmem:[%s3 + $0x88] sm:$0xff] %vm98, %v2358
  %2423 = vst.msk [vmem:[%s3 + $0x90] sm:$0xff] %vm98, %v2359
  %2424 = vst.msk [vmem:[%s3 + $0x98] sm:$0xff] %vm98, %v2360
  %2425 = vst.msk [vmem:[%s3 + $0xa0] sm:$0xff] %vm98, %v2361
  %2426 = vst.msk [vmem:[%s3 + $0xa8] sm:$0xff] %vm98, %v2362
  %2427 = vst.msk [vmem:[%s3 + $0xb0] sm:$0xff] %vm98, %v2363
  %2428 = vst.msk [vmem:[%s3 + $0xb8] sm:$0xff] %vm98, %v2364
  %2429 = vst.msk [vmem:[%s3 + $0xc0] sm:$0xff] %vm98, %v2365
  %2430 = vst.msk [vmem:[%s3 + $0xc8] sm:$0xff] %vm98, %v2366
  %2431 = vst.msk [vmem:[%s3 + $0xd0] sm:$0xff] %vm98, %v2367
  %2432 = vst.msk [vmem:[%s3 + $0xd8] sm:$0xff] %vm98, %v2368
  %2433 = vst.msk [vmem:[%s3 + $0xe0] sm:$0xff] %vm98, %v2369
  %2434 = vst.msk [vmem:[%s3 + $0xe8] sm:$0xff] %vm98, %v2370
  %2435 = vst.msk [vmem:[%s3 + $0xf0] sm:$0xff] %vm98, %v2371
  %2436 = vst.msk [vmem:[%s3 + $0xf8] sm:$0xff] %vm98, %v2372
  %2437 = vst.msk [vmem:[%s3 + $0x100] sm:$0xff] %vm98, %v2373
  %2438 = vst.msk [vmem:[%s3 + $0x108] sm:$0xff] %vm98, %v2374
  %2439 = vst.msk [vmem:[%s3 + $0x110] sm:$0xff] %vm98, %v2375
  %2440 = vst.msk [vmem:[%s3 + $0x118] sm:$0xff] %vm98, %v2376
  %2441 = vst.msk [vmem:[%s3 + $0x120] sm:$0xff] %vm98, %v2377
  %2442 = vst.msk [vmem:[%s3 + $0x128] sm:$0xff] %vm98, %v2378
  %2443 = vst.msk [vmem:[%s3 + $0x130] sm:$0xff] %vm98, %v2379
  %2444 = vst.msk [vmem:[%s3 + $0x138] sm:$0xff] %vm98, %v2380
  %2445 = vst.msk [vmem:[%s3 + $0x140] sm:$0xff] %vm98, %v2381
  %2446 = vst.msk [vmem:[%s3 + $0x148] sm:$0xff] %vm98, %v2382
  %2447 = vst.msk [vmem:[%s3 + $0x150] sm:$0xff] %vm98, %v2383
  %2448 = vst.msk [vmem:[%s3 + $0x158] sm:$0xff] %vm98, %v2384
  %2449 = vst.msk [vmem:[%s3 + $0x160] sm:$0xff] %vm98, %v2385
  %2450 = vst.msk [vmem:[%s3 + $0x168] sm:$0xff] %vm98, %v2386
  %2451 = vst.msk [vmem:[%s3 + $0x170] sm:$0xff] %vm98, %v2387
  %2452 = vst.msk [vmem:[%s3 + $0x178] sm:$0xff] %vm98, %v2388
  %2453 = vst.msk [vmem:[%s3 + $0x180] sm:$0xff] %vm98, %v2389
  %2454 = vst.msk [vmem:[%s3 + $0x188] sm:$0xff] %vm98, %v2390
  %2455 = vst.msk [vmem:[%s3 + $0x190] sm:$0xff] %vm98, %v2391
  %2456 = vst.msk [vmem:[%s3 + $0x198] sm:$0xff] %vm98, %v2392
  %2457 = vst.msk [vmem:[%s3 + $0x1a0] sm:$0xff] %vm98, %v2393
  %2458 = vst.msk [vmem:[%s3 + $0x1a8] sm:$0xff] %vm98, %v2394
  %2459 = vst.msk [vmem:[%s3 + $0x1b0] sm:$0xff] %vm98, %v2395
  %2460 = vst.msk [vmem:[%s3 + $0x1b8] sm:$0xff] %vm98, %v2396
  %2461 = vst.msk [vmem:[%s3 + $0x1c0] sm:$0xff] %vm98, %v2397
  %2462 = vst.msk [vmem:[%s3 + $0x1c8] sm:$0xff] %vm98, %v2398
  %2463 = vst.msk [vmem:[%s3 + $0x1d0] sm:$0xff] %vm98, %v2399
  %2464 = vst.msk [vmem:[%s3 + $0x1d8] sm:$0xff] %vm98, %v2400
  %2465 = vst.msk [vmem:[%s3 + $0x1e0] sm:$0xff] %vm98, %v2401
  %2466 = vst.msk [vmem:[%s3 + $0x1e8] sm:$0xff] %vm98, %v2402
  %2467 = vst.msk [vmem:[%s3 + $0x1f0] sm:$0xff] %vm98, %v2403
  %2468 = vst.msk [vmem:[%s3 + $0x1f8] sm:$0xff] %vm98, %v2404
  // Predicated region
  $region14: #{tpu_custom_call.1} parent=0 // pred_check
    _
  $region15: #{tpu_custom_call.1} parent=0 // pred_check_branch
    %2470 = sbr.rel (0) target = $region17
  $region16: #{tpu_custom_call.1} parent=0 // pred_region
    _
  $region17: #{tpu_custom_call.1} parent=0 // pred_fallthru
    _
  // Predicated region
  $region18: #{tpu_custom_call.1} parent=0 // pred_check
    _
  $region19: #{tpu_custom_call.1} parent=0 // pred_check_branch
    %2472 = sbr.rel (0) target = $region21
  $region20: #{tpu_custom_call.1} parent=0 // pred_region
    _
  $region21: #{tpu_custom_call.1} parent=0 // pred_fallthru
    _

</llo_original>
